<compile_context>
chip_gen: v7x
topology: tpu7x:2x2x1
jax: 0.10.0
libtpu: 0.0.40
codegen_flags: <defaults>
</compile_context>

<pallas_src>
import functools
import math

import jax
import jax.numpy as jnp
from jax import lax
from jax.experimental import pallas as pl
from jax.experimental.pallas import tpu as pltpu


# ----------------------------- helpers -----------------------------

def _pick_tile(dim, target, align):
    """Largest tile <= target that divides `dim` and is a multiple of `align`.
    Falls back to the full dim (always a legal BlockSpec block size).
    # TODO(synk): switch to pl.cdiv grids + masked last tiles for dims with no
    # nice divisor instead of falling back to the full dimension."""
    if dim <= target:
        return dim
    t = (target // align) * align
    while t >= align:
        if dim % t == 0:
            return t
        t -= align
    return dim


def _vmem_limit(tile_bytes):
    # Stay at the 32 MiB scoped default when the tiles fit; never request more
    # than 64 MiB (v7x physical VMEM per TensorCore).
    return int(min(64 * 1024 * 1024, max(32 * 1024 * 1024, 2 * tile_bytes)))


# ----------------------------- Pallas kernels -----------------------------

def linear_kernel(x_ref, w_ref, b_ref, o_ref, acc_ref, *, activation):
    k = pl.program_id(2)

    @pl.when(k == 0)
    def _():
        acc_ref[...] = jnp.zeros_like(acc_ref)

    acc_ref[...] += jnp.dot(x_ref[...], w_ref[...],
                            preferred_element_type=jnp.float32)

    @pl.when(k == pl.num_programs(2) - 1)
    def _():
        y = acc_ref[...] + b_ref[...]
        if activation == "gelu":
            # exact (erf) GELU, matching HF BERT "gelu".
            # TODO(synk): on v5e consider the tanh-approx GELU (EUP) if the
            # erf polynomial becomes the binding VALU slot.
            y = 0.5 * y * (1.0 + lax.erf(y * (1.0 / math.sqrt(2.0))))
        elif activation == "tanh":
            y = jnp.tanh(y)
        o_ref[...] = y.astype(o_ref.dtype)


def linear_res_ln_kernel(x_ref, w_ref, b_ref, r_ref, g_ref, beta_ref,
                         o_ref, acc_ref, *, eps):
    # y = LayerNorm(x @ w + b + residual), LN fused into the matmul epilogue.
    k = pl.program_id(1)

    @pl.when(k == 0)
    def _():
        acc_ref[...] = jnp.zeros_like(acc_ref)

    acc_ref[...] += jnp.dot(x_ref[...], w_ref[...],
                            preferred_element_type=jnp.float32)

    @pl.when(k == pl.num_programs(1) - 1)
    def _():
        # Output tile spans the full feature dim (tn == N), so stats are exact.
        y = acc_ref[...] + b_ref[...] + r_ref[...].astype(jnp.float32)
        mu = jnp.mean(y, axis=-1, keepdims=True)
        var = jnp.mean((y - mu) ** 2, axis=-1, keepdims=True)
        o_ref[...] = ((y - mu) * lax.rsqrt(var + eps)
                      * g_ref[...] + beta_ref[...]).astype(o_ref.dtype)


def layernorm_kernel(x_ref, g_ref, b_ref, o_ref, *, eps):
    x = x_ref[...].astype(jnp.float32)            # LN stats always in f32
    mu = jnp.mean(x, axis=-1, keepdims=True)
    var = jnp.mean((x - mu) ** 2, axis=-1, keepdims=True)
    o_ref[...] = ((x - mu) * lax.rsqrt(var + eps)
                  * g_ref[...] + b_ref[...]).astype(o_ref.dtype)


def attn_kernel(q_ref, k_ref, v_ref, m_ref, o_ref, *, scale):
    # Head-major batched attention for one (batch, q-tile) grid step.
    q = q_ref[0, 0]                    # (Hn, tq, Dh) bf16
    k = k_ref[0, 0]                    # (Hn, S,  Dh) bf16
    v = v_ref[0, 0]                    # (Hn, S,  Dh) bf16
    m = m_ref[0]                       # (1, S) f32 additive mask

    s = jnp.einsum('hqd,hkd->hqk', q, k,
                   preferred_element_type=jnp.float32) * scale
    s = s + m[None, :, :]
    s = s - jnp.max(s, axis=-1, keepdims=True)
    p = jnp.exp(s)
    p = p * pl.reciprocal(jnp.sum(p, axis=-1, keepdims=True), approx=True)
    ctx = jnp.einsum('hqk,hkd->hqd', p.astype(v.dtype), v,
                     preferred_element_type=jnp.float32)
    o_ref[0] = ctx.astype(o_ref.dtype)
    # TODO(synk): for long sequences (esp. v7x 64 MiB VMEM) convert to an
    # online-softmax (flash) form with a KV grid axis + f32 VMEM accumulators.


# ----------------------------- Pallas wrappers -----------------------------

def pallas_linear(x, w, b, activation=None,
                  tm_target=512, tn_target=512, tk_target=1024):
    M, K = x.shape
    N = w.shape[1]

    xb = x.astype(jnp.bfloat16)          # no-op: activations already bf16
    wb = w.astype(jnp.bfloat16)          # no-op: weights stored bf16
    b2 = b.reshape(1, N).astype(jnp.float32)

    tm = _pick_tile(M, tm_target, 16 if M % 16 == 0 else 8)
    tn = _pick_tile(N, tn_target, 256 if N % 256 == 0 else 128)
    tk = _pick_tile(K, tk_target, 256 if K % 256 == 0 else 128)
    grid = (M // tm, N // tn, K // tk)

    tile_bytes = 2 * (tm * tk + tk * tn + tm * tn) * 2 + tm * tn * 4 + tn * 8
    flops = 2 * M * N * K
    transcendentals = M * N if activation in ("gelu", "tanh") else 0
    bytes_accessed = (M * K + K * N + M * N) * 2 + N * 4

    kernel = functools.partial(linear_kernel, activation=activation)
    return pl.pallas_call(
        kernel,
        out_shape=jax.ShapeDtypeStruct((M, N), jnp.bfloat16),
        grid=grid,
        in_specs=[
            pl.BlockSpec((tm, tk), lambda i, j, k: (i, k)),
            pl.BlockSpec((tk, tn), lambda i, j, k: (k, j)),
            pl.BlockSpec((1, tn), lambda i, j, k: (0, j)),
        ],
        out_specs=pl.BlockSpec((tm, tn), lambda i, j, k: (i, j)),
        scratch_shapes=[pltpu.VMEM((tm, tn), jnp.float32)],
        compiler_params=pltpu.CompilerParams(
            dimension_semantics=("parallel", "parallel", "arbitrary"),
            vmem_limit_bytes=_vmem_limit(tile_bytes)),
        cost_estimate=pl.CostEstimate(
            flops=flops, transcendentals=transcendentals,
            bytes_accessed=bytes_accessed),
    )(xb, wb, b2)


def pallas_linear_res_ln(x, w, b, residual, gamma, beta, eps=1e-12,
                         tm_target=512, tk_target=1024):
    """LayerNorm(x @ w + b + residual) with LN fused into the matmul epilogue.
    The N axis is NOT tiled (tn == N) so each output tile holds full rows."""
    M, K = x.shape
    N = w.shape[1]

    xb = x.astype(jnp.bfloat16)
    wb = w.astype(jnp.bfloat16)
    rb = residual.astype(jnp.bfloat16)
    b2 = b.reshape(1, N).astype(jnp.float32)
    g2 = gamma.reshape(1, N).astype(jnp.float32)
    be2 = beta.reshape(1, N).astype(jnp.float32)

    tm = _pick_tile(M, tm_target, 16 if M % 16 == 0 else 8)
    tk = _pick_tile(K, tk_target, 256 if K % 256 == 0 else 128)
    grid = (M // tm, K // tk)

    tile_bytes = (2 * (tm * tk + tk * N + 2 * tm * N) * 2
                  + tm * N * 4 + 3 * N * 4)

    kernel = functools.partial(linear_res_ln_kernel, eps=eps)
    return pl.pallas_call(
        kernel,
        out_shape=jax.ShapeDtypeStruct((M, N), jnp.bfloat16),
        grid=grid,
        in_specs=[
            pl.BlockSpec((tm, tk), lambda i, k: (i, k)),
            pl.BlockSpec((tk, N), lambda i, k: (k, 0)),
            pl.BlockSpec((1, N), lambda i, k: (0, 0)),
            pl.BlockSpec((tm, N), lambda i, k: (i, 0)),
            pl.BlockSpec((1, N), lambda i, k: (0, 0)),
            pl.BlockSpec((1, N), lambda i, k: (0, 0)),
        ],
        out_specs=pl.BlockSpec((tm, N), lambda i, k: (i, 0)),
        scratch_shapes=[pltpu.VMEM((tm, N), jnp.float32)],
        compiler_params=pltpu.CompilerParams(
            dimension_semantics=("parallel", "arbitrary"),
            vmem_limit_bytes=_vmem_limit(tile_bytes)),
        cost_estimate=pl.CostEstimate(
            flops=2 * M * N * K, transcendentals=0,
            bytes_accessed=(M * K + K * N + 2 * M * N) * 2 + 3 * N * 4),
    )(xb, wb, b2, rb, g2, be2)


def pallas_layernorm(x, gamma, beta, eps=1e-12, tm_target=512):
    M, H = x.shape
    tm = _pick_tile(M, tm_target, 8)
    grid = (M // tm,)

    row_spec = pl.BlockSpec((tm, H), lambda i: (i, 0))
    vec_spec = pl.BlockSpec((1, H), lambda i: (0, 0))
    g2 = gamma.reshape(1, H).astype(jnp.float32)
    b2 = beta.reshape(1, H).astype(jnp.float32)

    return pl.pallas_call(
        functools.partial(layernorm_kernel, eps=eps),
        out_shape=jax.ShapeDtypeStruct((M, H), jnp.bfloat16),
        grid=grid,
        in_specs=[row_spec, vec_spec, vec_spec],
        out_specs=row_spec,
        compiler_params=pltpu.CompilerParams(
            dimension_semantics=("parallel",)),
    )(x, g2, b2)


def pallas_attention(qkv, mask_add, batch, seq, num_heads, tq_target=256):
    """qkv: (B*S, 3H) bf16 fused projection output. Returns (B*S, H) bf16."""
    B, S = batch, seq
    H = qkv.shape[-1] // 3
    Dh = H // num_heads
    scale = 1.0 / math.sqrt(Dh)

    # One head-major relayout per layer (XLA pass) instead of materializing
    # three separate Q/K/V column slices; makes every in-kernel matmul a clean
    # heads-leading batched dot with no lane slicing or concatenates.
    qkv_h = qkv.reshape(B, S, 3, num_heads, Dh).transpose(0, 2, 3, 1, 4)
    # qkv_h: (B, 3, Hn, S, Dh)

    tq = _pick_tile(S, tq_target, 8)
    grid = (B, S // tq)

    flops = 4 * B * S * S * H
    transcendentals = B * num_heads * S * S
    bytes_accessed = 3 * B * S * H * 2 + B * S * 4 + B * S * H * 2
    tile_bytes = (2 * (num_heads * tq * Dh + 2 * num_heads * S * Dh
                       + num_heads * tq * Dh) * 2
                  + 2 * num_heads * tq * S * 4)

    out = pl.pallas_call(
        functools.partial(attn_kernel, scale=scale),
        out_shape=jax.ShapeDtypeStruct((B, num_heads, S, Dh), jnp.bfloat16),
        grid=grid,
        in_specs=[
            pl.BlockSpec((1, 1, num_heads, tq, Dh),
                         lambda b, q: (b, 0, 0, q, 0)),     # Q block
            pl.BlockSpec((1, 1, num_heads, S, Dh),
                         lambda b, q: (b, 1, 0, 0, 0)),     # K block
            pl.BlockSpec((1, 1, num_heads, S, Dh),
                         lambda b, q: (b, 2, 0, 0, 0)),     # V block
            pl.BlockSpec((1, 1, S), lambda b, q: (b, 0, 0)),
        ],
        out_specs=pl.BlockSpec((1, num_heads, tq, Dh),
                               lambda b, q: (b, 0, q, 0)),
        compiler_params=pltpu.CompilerParams(
            dimension_semantics=("parallel", "parallel"),
            vmem_limit_bytes=_vmem_limit(tile_bytes)),
        cost_estimate=pl.CostEstimate(
            flops=flops, transcendentals=transcendentals,
            bytes_accessed=bytes_accessed),
    )(qkv_h, qkv_h, qkv_h, mask_add.astype(jnp.float32))

    # back to token-major (B*S, H) for the output projection
    return out.transpose(0, 2, 1, 3).reshape(B * S, H)


# ----------------------------- BERT (synthetic params) -----------------------------

CFG = dict(
    vocab_size=100,
    type_vocab_size=2,
    max_position=64,
    hidden=32,
    num_layers=2,
    num_heads=4,
    intermediate=64,
)


def init_params(key, cfg):
    H, I = cfg["hidden"], cfg["intermediate"]
    std = 0.02
    keys = iter(jax.random.split(key, 8 + 8 * cfg["num_layers"]))

    def w(shape, dtype=jnp.float32):
        return (std * jax.random.normal(next(keys), shape)).astype(dtype)

    p = {
        "word_emb": w((cfg["vocab_size"], H)),
        "pos_emb": w((cfg["max_position"], H)),
        "type_emb": w((cfg["type_vocab_size"], H)),
        "emb_ln_g": jnp.ones((H,), jnp.float32),
        "emb_ln_b": jnp.zeros((H,), jnp.float32),
        # matmul weights stored bf16: zero runtime casts, half the weight DMA
        "pool_w": w((H, H), jnp.bfloat16),
        "pool_b": jnp.zeros((H,), jnp.float32),
        "layers": [],
    }
    for _ in range(cfg["num_layers"]):
        layer = {
            # fused Q|K|V projection: one MXU pass over the activations
            "wqkv": w((H, 3 * H), jnp.bfloat16),
            "bqkv": jnp.zeros((3 * H,), jnp.float32),
            "wo": w((H, H), jnp.bfloat16), "bo": jnp.zeros((H,), jnp.float32),
            "ln1_g": jnp.ones((H,), jnp.float32),
            "ln1_b": jnp.zeros((H,), jnp.float32),
            "wi": w((H, I), jnp.bfloat16), "bi": jnp.zeros((I,), jnp.float32),
            "wo2": w((I, H), jnp.bfloat16), "bo2": jnp.zeros((H,), jnp.float32),
            "ln2_g": jnp.ones((H,), jnp.float32),
            "ln2_b": jnp.zeros((H,), jnp.float32),
        }
        p["layers"].append(layer)
    return p


def bert_pooled_forward(params, input_ids, token_type_ids, attention_mask, cfg):
    B, S = input_ids.shape
    H = cfg["hidden"]
    Hn = cfg["num_heads"]

    # --- embeddings (gather = glue) + LayerNorm (Pallas, bf16 out) ---
    emb = (params["word_emb"][input_ids]
           + params["pos_emb"][:S][None, :, :]
           + params["type_emb"][token_type_ids])
    x = pallas_layernorm(emb.reshape(B * S, H),
                         params["emb_ln_g"], params["emb_ln_b"])

    # additive attention mask, one row per batch (broadcast in-kernel)
    mask_add = ((1.0 - attention_mask.astype(jnp.float32)) * -1e9).reshape(B, 1, S)

    for lyr in params["layers"]:
        # fused QKV projection -> head-major attention (no Q/K/V slice copies)
        qkv = pallas_linear(x, lyr["wqkv"], lyr["bqkv"])        # (B*S, 3H) bf16
        ctx = pallas_attention(qkv, mask_add, B, S, Hn)         # (B*S, H)  bf16

        # attention output projection + residual + LayerNorm (fused epilogue)
        x = pallas_linear_res_ln(ctx, lyr["wo"], lyr["bo"],
                                 residual=x,
                                 gamma=lyr["ln1_g"], beta=lyr["ln1_b"])

        # FFN: GELU intermediate, then output projection + residual + LN fused
        ff = pallas_linear(x, lyr["wi"], lyr["bi"], activation="gelu")
        x = pallas_linear_res_ln(ff, lyr["wo2"], lyr["bo2"],
                                 residual=x,
                                 gamma=lyr["ln2_g"], beta=lyr["ln2_b"])

    h = x.reshape(B, S, H)

    # --- pooler: dense(tanh) on the [CLS] token ---
    cls = h[:, 0, :]                                            # (B, H)
    pooled = pallas_linear(cls, params["pool_w"], params["pool_b"],
                           activation="tanh")
    return pooled


# ----------------------------- main -----------------------------

if __name__ == "__main__":
    key = jax.random.PRNGKey(0)
    k_param, k_ids = jax.random.split(key)

    B, S = 2, 8
    params = init_params(k_param, CFG)

    input_ids = jax.random.randint(k_ids, (B, S), 0, CFG["vocab_size"],
                                   dtype=jnp.int32)
    token_type_ids = jnp.zeros((B, S), jnp.int32)
    attention_mask = jnp.ones((B, S), jnp.int32)

    fwd = jax.jit(functools.partial(bert_pooled_forward, cfg=CFG))
    pooled = fwd(params, input_ids, token_type_ids, attention_mask)
    pooled = jax.block_until_ready(pooled)

    assert pooled.shape == (B, CFG["hidden"])
    assert bool(jnp.all(jnp.isfinite(pooled.astype(jnp.float32))))
    print("KERNEL_OK")
</pallas_src>

<mosaic_0001>
module attributes {stable_mosaic.version = 11 : i64} {
  func.func @layernorm_kernel(%arg0: i32, %arg1: memref<16x32xf32, #tpu.memory_space<vmem>>, %arg2: memref<1x32xf32, #tpu.memory_space<vmem>>, %arg3: memref<1x32xf32, #tpu.memory_space<vmem>>, %arg4: memref<16x32xbf16, #tpu.memory_space<vmem>>) attributes {dimension_semantics = [#tpu.dimension_semantics<parallel>], iteration_bounds = array<i64: 1>, scalar_prefetch = 0 : i64, scratch_operands = 0 : i64, tpu.core_type = #tpu.core_type<tc>, window_params = [{transform_indices = @transform_0, window_bounds = array<i64: 16, 32>}, {pipeline_mode = #tpu.pipeline_mode<synchronous>, transform_indices = @transform_1, window_bounds = array<i64: 1, 32>}, {pipeline_mode = #tpu.pipeline_mode<synchronous>, transform_indices = @transform_2, window_bounds = array<i64: 1, 32>}, {transform_indices = @transform_3, window_bounds = array<i64: 16, 32>}]} {
    %c0 = arith.constant 0 : index
    %c0_0 = arith.constant 0 : index
    %0 = vector.load %arg1[%c0, %c0_0] : memref<16x32xf32, #tpu.memory_space<vmem>>, vector<16x32xf32>
    %cst = arith.constant dense<0.000000e+00> : vector<16xf32>
    %1 = vector.multi_reduction <add>, %0, %cst [1] : vector<16x32xf32> to vector<16xf32>
    %2 = vector.shape_cast %1 : vector<16xf32> to vector<16x1xf32>
    %cst_1 = arith.constant 3.200000e+01 : f32
    %3 = vector.broadcast %cst_1 : f32 to vector<16x1xf32>
    %4 = arith.divf %2, %3 : vector<16x1xf32>
    %5 = vector.broadcast %4 : vector<16x1xf32> to vector<16x32xf32>
    %6 = arith.subf %0, %5 : vector<16x32xf32>
    %7 = arith.mulf %6, %6 : vector<16x32xf32>
    %cst_2 = arith.constant dense<0.000000e+00> : vector<16xf32>
    %8 = vector.multi_reduction <add>, %7, %cst_2 [1] : vector<16x32xf32> to vector<16xf32>
    %9 = vector.shape_cast %8 : vector<16xf32> to vector<16x1xf32>
    %cst_3 = arith.constant 3.200000e+01 : f32
    %10 = vector.broadcast %cst_3 : f32 to vector<16x1xf32>
    %11 = arith.divf %9, %10 : vector<16x1xf32>
    %12 = vector.broadcast %4 : vector<16x1xf32> to vector<16x32xf32>
    %13 = arith.subf %0, %12 : vector<16x32xf32>
    %cst_4 = arith.constant 9.99999996E-13 : f32
    %14 = vector.broadcast %cst_4 : f32 to vector<16x1xf32>
    %15 = arith.addf %11, %14 : vector<16x1xf32>
    %16 = math.rsqrt %15 : vector<16x1xf32>
    %17 = vector.broadcast %16 : vector<16x1xf32> to vector<16x32xf32>
    %18 = arith.mulf %13, %17 : vector<16x32xf32>
    %c0_5 = arith.constant 0 : index
    %c0_6 = arith.constant 0 : index
    %19 = vector.load %arg2[%c0_5, %c0_6] : memref<1x32xf32, #tpu.memory_space<vmem>>, vector<1x32xf32>
    %20 = vector.broadcast %19 : vector<1x32xf32> to vector<16x32xf32>
    %21 = arith.mulf %18, %20 : vector<16x32xf32>
    %c0_7 = arith.constant 0 : index
    %c0_8 = arith.constant 0 : index
    %22 = vector.load %arg3[%c0_7, %c0_8] : memref<1x32xf32, #tpu.memory_space<vmem>>, vector<1x32xf32>
    %23 = vector.broadcast %22 : vector<1x32xf32> to vector<16x32xf32>
    %24 = arith.addf %21, %23 : vector<16x32xf32>
    %25 = arith.truncf %24 : vector<16x32xf32> to vector<16x32xbf16>
    %c0_9 = arith.constant 0 : index
    %c0_10 = arith.constant 0 : index
    %26 = vector.load %arg4[%c0_9, %c0_10] : memref<16x32xbf16, #tpu.memory_space<vmem>>, vector<16x32xbf16>
    tpu.vector_store %arg4[%c0_9, %c0_10], %25 {strides = array<i32>} : memref<16x32xbf16, #tpu.memory_space<vmem>>, vector<16x32xbf16>,
    return
  }
  func.func @transform_0(%arg0: i32) -> (i32, i32) {
    %c0_i32 = arith.constant 0 : i32
    %c0_i32_0 = arith.constant 0 : i32
    return %arg0, %c0_i32 : i32, i32
  }
  func.func @transform_1(%arg0: i32) -> (i32, i32) {
    %c0_i32 = arith.constant 0 : i32
    %c0_i32_0 = arith.constant 0 : i32
    %c0_i32_1 = arith.constant 0 : i32
    return %c0_i32, %c0_i32_0 : i32, i32
  }
  func.func @transform_2(%arg0: i32) -> (i32, i32) {
    %c0_i32 = arith.constant 0 : i32
    %c0_i32_0 = arith.constant 0 : i32
    %c0_i32_1 = arith.constant 0 : i32
    return %c0_i32, %c0_i32_0 : i32, i32
  }
  func.func @transform_3(%arg0: i32) -> (i32, i32) {
    %c0_i32 = arith.constant 0 : i32
    %c0_i32_0 = arith.constant 0 : i32
    return %arg0, %c0_i32 : i32, i32
  }
}

module attributes {stable_mosaic.version = 11 : i64} {
  func.func @linear_kernel(%arg0: i32, %arg1: i32, %arg2: i32, %arg3: memref<16x32xbf16, #tpu.memory_space<vmem>>, %arg4: memref<32x96xbf16, #tpu.memory_space<vmem>>, %arg5: memref<1x96xf32, #tpu.memory_space<vmem>>, %arg6: memref<16x96xbf16, #tpu.memory_space<vmem>>, %arg7: memref<16x96xf32, #tpu.memory_space<vmem>>) attributes {dimension_semantics = [#tpu.dimension_semantics<parallel>, #tpu.dimension_semantics<parallel>, #tpu.dimension_semantics<arbitrary>], iteration_bounds = array<i64: 1, 1, 1>, scalar_prefetch = 0 : i64, scratch_operands = 1 : i64, tpu.core_type = #tpu.core_type<tc>, window_params = [{transform_indices = @transform_0, window_bounds = array<i64: 16, 32>}, {transform_indices = @transform_1, window_bounds = array<i64: 32, 96>}, {transform_indices = @transform_2, window_bounds = array<i64: 1, 96>}, {transform_indices = @transform_3, window_bounds = array<i64: 16, 96>}]} {
    %c0_i32 = arith.constant 0 : i32
    %0 = arith.cmpi eq, %arg2, %c0_i32 : i32
    %1 = arith.extui %0 : i1 to i32
    %c0_i32_0 = arith.constant 0 : i32
    %2 = arith.cmpi ne, %1, %c0_i32_0 : i32
    scf.if %2 {
      %cst_10 = arith.constant 0.000000e+00 : f32
      %12 = vector.broadcast %cst_10 : f32 to vector<16x96xf32>
      %c0_11 = arith.constant 0 : index
      %c0_12 = arith.constant 0 : index
      %13 = vector.load %arg7[%c0_11, %c0_12] : memref<16x96xf32, #tpu.memory_space<vmem>>, vector<16x96xf32>
      tpu.vector_store %arg7[%c0_11, %c0_12], %12 {strides = array<i32>} : memref<16x96xf32, #tpu.memory_space<vmem>>, vector<16x96xf32>,
    } else {
    }
    %c0 = arith.constant 0 : index
    %c0_1 = arith.constant 0 : index
    %3 = vector.load %arg7[%c0, %c0_1] : memref<16x96xf32, #tpu.memory_space<vmem>>, vector<16x96xf32>
    %c0_2 = arith.constant 0 : index
    %c0_3 = arith.constant 0 : index
    %4 = vector.load %arg3[%c0_2, %c0_3] : memref<16x32xbf16, #tpu.memory_space<vmem>>, vector<16x32xbf16>
    %c0_4 = arith.constant 0 : index
    %c0_5 = arith.constant 0 : index
    %5 = vector.load %arg4[%c0_4, %c0_5] : memref<32x96xbf16, #tpu.memory_space<vmem>>, vector<32x96xbf16>
    %cst = arith.constant dense<0.000000e+00> : vector<16x96xf32>
    %6 = tpu.matmul %4, %5, %cst {dimension_numbers = #tpu.dot_dimension_numbers<[1], [0], [0], [1], [0, 0, 1, 1], [], []>} : vector<16x32xbf16>, vector<32x96xbf16>, vector<16x96xf32> -> vector<16x96xf32>
    %7 = arith.addf %3, %6 : vector<16x96xf32>
    %c0_6 = arith.constant 0 : index
    %c0_7 = arith.constant 0 : index
    %8 = vector.load %arg7[%c0_6, %c0_7] : memref<16x96xf32, #tpu.memory_space<vmem>>, vector<16x96xf32>
    tpu.vector_store %arg7[%c0_6, %c0_7], %7 {strides = array<i32>} : memref<16x96xf32, #tpu.memory_space<vmem>>, vector<16x96xf32>,
    %c0_i32_8 = arith.constant 0 : i32
    %9 = arith.cmpi eq, %arg2, %c0_i32_8 : i32
    %10 = arith.extui %9 : i1 to i32
    %c0_i32_9 = arith.constant 0 : i32
    %11 = arith.cmpi ne, %10, %c0_i32_9 : i32
    scf.if %11 {
      %c0_10 = arith.constant 0 : index
      %c0_11 = arith.constant 0 : index
      %12 = vector.load %arg7[%c0_10, %c0_11] : memref<16x96xf32, #tpu.memory_space<vmem>>, vector<16x96xf32>
      %c0_12 = arith.constant 0 : index
      %c0_13 = arith.constant 0 : index
      %13 = vector.load %arg5[%c0_12, %c0_13] : memref<1x96xf32, #tpu.memory_space<vmem>>, vector<1x96xf32>
      %14 = vector.broadcast %13 : vector<1x96xf32> to vector<16x96xf32>
      %15 = arith.addf %12, %14 : vector<16x96xf32>
      %16 = arith.truncf %15 : vector<16x96xf32> to vector<16x96xbf16>
      %c0_14 = arith.constant 0 : index
      %c0_15 = arith.constant 0 : index
      %17 = vector.load %arg6[%c0_14, %c0_15] : memref<16x96xbf16, #tpu.memory_space<vmem>>, vector<16x96xbf16>
      tpu.vector_store %arg6[%c0_14, %c0_15], %16 {strides = array<i32>} : memref<16x96xbf16, #tpu.memory_space<vmem>>, vector<16x96xbf16>,
    } else {
    }
    return
  }
  func.func @transform_0(%arg0: i32, %arg1: i32, %arg2: i32) -> (i32, i32) {
    %c0_i32 = arith.constant 0 : i32
    return %arg0, %arg2 : i32, i32
  }
  func.func @transform_1(%arg0: i32, %arg1: i32, %arg2: i32) -> (i32, i32) {
    %c0_i32 = arith.constant 0 : i32
    return %arg2, %arg1 : i32, i32
  }
  func.func @transform_2(%arg0: i32, %arg1: i32, %arg2: i32) -> (i32, i32) {
    %c0_i32 = arith.constant 0 : i32
    %c0_i32_0 = arith.constant 0 : i32
    return %c0_i32, %arg1 : i32, i32
  }
  func.func @transform_3(%arg0: i32, %arg1: i32, %arg2: i32) -> (i32, i32) {
    %c0_i32 = arith.constant 0 : i32
    return %arg0, %arg1 : i32, i32
  }
}

module attributes {stable_mosaic.version = 11 : i64} {
  func.func @attn_kernel(%arg0: i32, %arg1: i32, %arg2: memref<1x1x4x8x8xbf16, #tpu.memory_space<vmem>>, %arg3: memref<1x1x4x8x8xbf16, #tpu.memory_space<vmem>>, %arg4: memref<1x1x4x8x8xbf16, #tpu.memory_space<vmem>>, %arg5: memref<1x1x8xf32, #tpu.memory_space<vmem>>, %arg6: memref<1x4x8x8xbf16, #tpu.memory_space<vmem>>) attributes {dimension_semantics = [#tpu.dimension_semantics<parallel>, #tpu.dimension_semantics<parallel>], iteration_bounds = array<i64: 2, 1>, scalar_prefetch = 0 : i64, scratch_operands = 0 : i64, tpu.core_type = #tpu.core_type<tc>, window_params = [{transform_indices = @transform_0, window_bounds = array<i64: 1, 1, 4, 8, 8>}, {transform_indices = @transform_1, window_bounds = array<i64: 1, 1, 4, 8, 8>}, {transform_indices = @transform_2, window_bounds = array<i64: 1, 1, 4, 8, 8>}, {transform_indices = @transform_3, window_bounds = array<i64: 1, 1, 8>}, {transform_indices = @transform_4, window_bounds = array<i64: 1, 4, 8, 8>}]} {
    %c0 = arith.constant 0 : index
    %c0_0 = arith.constant 0 : index
    %c0_1 = arith.constant 0 : index
    %c0_2 = arith.constant 0 : index
    %c0_3 = arith.constant 0 : index
    %0 = vector.load %arg2[%c0, %c0_0, %c0_1, %c0_2, %c0_3] : memref<1x1x4x8x8xbf16, #tpu.memory_space<vmem>>, vector<1x1x4x8x8xbf16>
    %1 = vector.shape_cast %0 : vector<1x1x4x8x8xbf16> to vector<4x8x8xbf16>
    %c0_4 = arith.constant 0 : index
    %c0_5 = arith.constant 0 : index
    %c0_6 = arith.constant 0 : index
    %c0_7 = arith.constant 0 : index
    %c0_8 = arith.constant 0 : index
    %2 = vector.load %arg3[%c0_4, %c0_5, %c0_6, %c0_7, %c0_8] : memref<1x1x4x8x8xbf16, #tpu.memory_space<vmem>>, vector<1x1x4x8x8xbf16>
    %3 = vector.shape_cast %2 : vector<1x1x4x8x8xbf16> to vector<4x8x8xbf16>
    %c0_9 = arith.constant 0 : index
    %c0_10 = arith.constant 0 : index
    %c0_11 = arith.constant 0 : index
    %c0_12 = arith.constant 0 : index
    %c0_13 = arith.constant 0 : index
    %4 = vector.load %arg4[%c0_9, %c0_10, %c0_11, %c0_12, %c0_13] : memref<1x1x4x8x8xbf16, #tpu.memory_space<vmem>>, vector<1x1x4x8x8xbf16>
    %5 = vector.shape_cast %4 : vector<1x1x4x8x8xbf16> to vector<4x8x8xbf16>
    %c0_14 = arith.constant 0 : index
    %c0_15 = arith.constant 0 : index
    %c0_16 = arith.constant 0 : index
    %6 = vector.load %arg5[%c0_14, %c0_15, %c0_16] : memref<1x1x8xf32, #tpu.memory_space<vmem>>, vector<1x1x8xf32>
    %7 = vector.shape_cast %6 : vector<1x1x8xf32> to vector<1x8xf32>
    "tpu.trace_start"() <{level = 10 : i32, message = "hqd,hkd->hqk"}> : () -> ()
    %cst = arith.constant dense<0.000000e+00> : vector<4x8x8xf32>
    %8 = tpu.matmul %1, %3, %cst {dimension_numbers = #tpu.dot_dimension_numbers<[2], [2], [1], [1], [0, 0, 0, 1, 1, 1], [0], [0]>} : vector<4x8x8xbf16>, vector<4x8x8xbf16>, vector<4x8x8xf32> -> vector<4x8x8xf32>
    "tpu.trace_stop"() : () -> ()
    %cst_17 = arith.constant 0.353553385 : f32
    %9 = vector.broadcast %cst_17 : f32 to vector<4x8x8xf32>
    %10 = arith.mulf %8, %9 : vector<4x8x8xf32>
    %11 = vector.shape_cast %7 : vector<1x8xf32> to vector<1x1x8xf32>
    %12 = vector.broadcast %11 : vector<1x1x8xf32> to vector<4x8x8xf32>
    %13 = arith.addf %10, %12 : vector<4x8x8xf32>
    %cst_18 = arith.constant dense<0xFF800000> : vector<4x8xf32>
    %14 = vector.multi_reduction <maximumf>, %13, %cst_18 [2] : vector<4x8x8xf32> to vector<4x8xf32>
    %15 = vector.shape_cast %14 : vector<4x8xf32> to vector<4x8x1xf32>
    %16 = vector.broadcast %15 : vector<4x8x1xf32> to vector<4x8x8xf32>
    %17 = arith.subf %13, %16 : vector<4x8x8xf32>
    %18 = math.exp %17 : vector<4x8x8xf32>
    %cst_19 = arith.constant dense<0.000000e+00> : vector<4x8xf32>
    %19 = vector.multi_reduction <add>, %18, %cst_19 [2] : vector<4x8x8xf32> to vector<4x8xf32>
    %20 = vector.shape_cast %19 : vector<4x8xf32> to vector<4x8x1xf32>
    %21 = tpu.reciprocal %20 {approx = true} : vector<4x8x1xf32> -> vector<4x8x1xf32>
    %22 = vector.broadcast %21 : vector<4x8x1xf32> to vector<4x8x8xf32>
    %23 = arith.mulf %18, %22 : vector<4x8x8xf32>
    %24 = arith.truncf %23 : vector<4x8x8xf32> to vector<4x8x8xbf16>
    "tpu.trace_start"() <{level = 10 : i32, message = "hqk,hkd->hqd"}> : () -> ()
    %cst_20 = arith.constant dense<0.000000e+00> : vector<4x8x8xf32>
    %25 = tpu.matmul %24, %5, %cst_20 {dimension_numbers = #tpu.dot_dimension_numbers<[2], [1], [1], [2], [0, 0, 0, 1, 1, 2], [0], [0]>} : vector<4x8x8xbf16>, vector<4x8x8xbf16>, vector<4x8x8xf32> -> vector<4x8x8xf32>
    "tpu.trace_stop"() : () -> ()
    %26 = arith.truncf %25 : vector<4x8x8xf32> to vector<4x8x8xbf16>
    %c0_21 = arith.constant 0 : index
    %c0_22 = arith.constant 0 : index
    %c0_23 = arith.constant 0 : index
    %c0_24 = arith.constant 0 : index
    %27 = vector.load %arg6[%c0_21, %c0_22, %c0_23, %c0_24] : memref<1x4x8x8xbf16, #tpu.memory_space<vmem>>, vector<1x4x8x8xbf16>
    %28 = vector.shape_cast %27 : vector<1x4x8x8xbf16> to vector<4x8x8xbf16>
    %29 = vector.shape_cast %26 : vector<4x8x8xbf16> to vector<1x4x8x8xbf16>
    tpu.vector_store %arg6[%c0_21, %c0_22, %c0_23, %c0_24], %29 {strides = array<i32>} : memref<1x4x8x8xbf16, #tpu.memory_space<vmem>>, vector<1x4x8x8xbf16>,
    return
  }
  func.func @transform_0(%arg0: i32, %arg1: i32) -> (i32, i32, i32, i32, i32) {
    %c0_i32 = arith.constant 0 : i32
    %c0_i32_0 = arith.constant 0 : i32
    %c0_i32_1 = arith.constant 0 : i32
    %c0_i32_2 = arith.constant 0 : i32
    return %arg0, %c0_i32, %c0_i32_0, %arg1, %c0_i32_1 : i32, i32, i32, i32, i32
  }
  func.func @transform_1(%arg0: i32, %arg1: i32) -> (i32, i32, i32, i32, i32) {
    %c1_i32 = arith.constant 1 : i32
    %c0_i32 = arith.constant 0 : i32
    %c0_i32_0 = arith.constant 0 : i32
    %c0_i32_1 = arith.constant 0 : i32
    %c0_i32_2 = arith.constant 0 : i32
    return %arg0, %c1_i32, %c0_i32, %c0_i32_0, %c0_i32_1 : i32, i32, i32, i32, i32
  }
  func.func @transform_2(%arg0: i32, %arg1: i32) -> (i32, i32, i32, i32, i32) {
    %c2_i32 = arith.constant 2 : i32
    %c0_i32 = arith.constant 0 : i32
    %c0_i32_0 = arith.constant 0 : i32
    %c0_i32_1 = arith.constant 0 : i32
    %c0_i32_2 = arith.constant 0 : i32
    return %arg0, %c2_i32, %c0_i32, %c0_i32_0, %c0_i32_1 : i32, i32, i32, i32, i32
  }
  func.func @transform_3(%arg0: i32, %arg1: i32) -> (i32, i32, i32) {
    %c0_i32 = arith.constant 0 : i32
    %c0_i32_0 = arith.constant 0 : i32
    %c0_i32_1 = arith.constant 0 : i32
    return %arg0, %c0_i32, %c0_i32_0 : i32, i32, i32
  }
  func.func @transform_4(%arg0: i32, %arg1: i32) -> (i32, i32, i32, i32) {
    %c0_i32 = arith.constant 0 : i32
    %c0_i32_0 = arith.constant 0 : i32
    %c0_i32_1 = arith.constant 0 : i32
    return %arg0, %c0_i32, %arg1, %c0_i32_0 : i32, i32, i32, i32
  }
}

module attributes {stable_mosaic.version = 11 : i64} {
  func.func @linear_res_ln_kernel(%arg0: i32, %arg1: i32, %arg2: memref<16x32xbf16, #tpu.memory_space<vmem>>, %arg3: memref<32x32xbf16, #tpu.memory_space<vmem>>, %arg4: memref<1x32xf32, #tpu.memory_space<vmem>>, %arg5: memref<16x32xbf16, #tpu.memory_space<vmem>>, %arg6: memref<1x32xf32, #tpu.memory_space<vmem>>, %arg7: memref<1x32xf32, #tpu.memory_space<vmem>>, %arg8: memref<16x32xbf16, #tpu.memory_space<vmem>>, %arg9: memref<16x32xf32, #tpu.memory_space<vmem>>) attributes {dimension_semantics = [#tpu.dimension_semantics<parallel>, #tpu.dimension_semantics<arbitrary>], iteration_bounds = array<i64: 1, 1>, scalar_prefetch = 0 : i64, scratch_operands = 1 : i64, tpu.core_type = #tpu.core_type<tc>, window_params = [{transform_indices = @transform_0, window_bounds = array<i64: 16, 32>}, {transform_indices = @transform_1, window_bounds = array<i64: 32, 32>}, {pipeline_mode = #tpu.pipeline_mode<synchronous>, transform_indices = @transform_2, window_bounds = array<i64: 1, 32>}, {transform_indices = @transform_3, window_bounds = array<i64: 16, 32>}, {pipeline_mode = #tpu.pipeline_mode<synchronous>, transform_indices = @transform_4, window_bounds = array<i64: 1, 32>}, {pipeline_mode = #tpu.pipeline_mode<synchronous>, transform_indices = @transform_5, window_bounds = array<i64: 1, 32>}, {transform_indices = @transform_6, window_bounds = array<i64: 16, 32>}]} {
    %c0_i32 = arith.constant 0 : i32
    %0 = arith.cmpi eq, %arg1, %c0_i32 : i32
    %1 = arith.extui %0 : i1 to i32
    %c0_i32_0 = arith.constant 0 : i32
    %2 = arith.cmpi ne, %1, %c0_i32_0 : i32
    scf.if %2 {
      %cst_10 = arith.constant 0.000000e+00 : f32
      %12 = vector.broadcast %cst_10 : f32 to vector<16x32xf32>
      %c0_11 = arith.constant 0 : index
      %c0_12 = arith.constant 0 : index
      %13 = vector.load %arg9[%c0_11, %c0_12] : memref<16x32xf32, #tpu.memory_space<vmem>>, vector<16x32xf32>
      tpu.vector_store %arg9[%c0_11, %c0_12], %12 {strides = array<i32>} : memref<16x32xf32, #tpu.memory_space<vmem>>, vector<16x32xf32>,
    } else {
    }
    %c0 = arith.constant 0 : index
    %c0_1 = arith.constant 0 : index
    %3 = vector.load %arg9[%c0, %c0_1] : memref<16x32xf32, #tpu.memory_space<vmem>>, vector<16x32xf32>
    %c0_2 = arith.constant 0 : index
    %c0_3 = arith.constant 0 : index
    %4 = vector.load %arg2[%c0_2, %c0_3] : memref<16x32xbf16, #tpu.memory_space<vmem>>, vector<16x32xbf16>
    %c0_4 = arith.constant 0 : index
    %c0_5 = arith.constant 0 : index
    %5 = vector.load %arg3[%c0_4, %c0_5] : memref<32x32xbf16, #tpu.memory_space<vmem>>, vector<32x32xbf16>
    %cst = arith.constant dense<0.000000e+00> : vector<16x32xf32>
    %6 = tpu.matmul %4, %5, %cst {dimension_numbers = #tpu.dot_dimension_numbers<[1], [0], [0], [1], [0, 0, 1, 1], [], []>} : vector<16x32xbf16>, vector<32x32xbf16>, vector<16x32xf32> -> vector<16x32xf32>
    %7 = arith.addf %3, %6 : vector<16x32xf32>
    %c0_6 = arith.constant 0 : index
    %c0_7 = arith.constant 0 : index
    %8 = vector.load %arg9[%c0_6, %c0_7] : memref<16x32xf32, #tpu.memory_space<vmem>>, vector<16x32xf32>
    tpu.vector_store %arg9[%c0_6, %c0_7], %7 {strides = array<i32>} : memref<16x32xf32, #tpu.memory_space<vmem>>, vector<16x32xf32>,
    %c0_i32_8 = arith.constant 0 : i32
    %9 = arith.cmpi eq, %arg1, %c0_i32_8 : i32
    %10 = arith.extui %9 : i1 to i32
    %c0_i32_9 = arith.constant 0 : i32
    %11 = arith.cmpi ne, %10, %c0_i32_9 : i32
    scf.if %11 {
      %c0_10 = arith.constant 0 : index
      %c0_11 = arith.constant 0 : index
      %12 = vector.load %arg9[%c0_10, %c0_11] : memref<16x32xf32, #tpu.memory_space<vmem>>, vector<16x32xf32>
      %c0_12 = arith.constant 0 : index
      %c0_13 = arith.constant 0 : index
      %13 = vector.load %arg4[%c0_12, %c0_13] : memref<1x32xf32, #tpu.memory_space<vmem>>, vector<1x32xf32>
      %14 = vector.broadcast %13 : vector<1x32xf32> to vector<16x32xf32>
      %15 = arith.addf %12, %14 : vector<16x32xf32>
      %c0_14 = arith.constant 0 : index
      %c0_15 = arith.constant 0 : index
      %16 = vector.load %arg5[%c0_14, %c0_15] : memref<16x32xbf16, #tpu.memory_space<vmem>>, vector<16x32xbf16>
      %17 = arith.extf %16 : vector<16x32xbf16> to vector<16x32xf32>
      %18 = arith.addf %15, %17 : vector<16x32xf32>
      %cst_16 = arith.constant dense<0.000000e+00> : vector<16xf32>
      %19 = vector.multi_reduction <add>, %18, %cst_16 [1] : vector<16x32xf32> to vector<16xf32>
      %20 = vector.shape_cast %19 : vector<16xf32> to vector<16x1xf32>
      %cst_17 = arith.constant 3.200000e+01 : f32
      %21 = vector.broadcast %cst_17 : f32 to vector<16x1xf32>
      %22 = arith.divf %20, %21 : vector<16x1xf32>
      %23 = vector.broadcast %22 : vector<16x1xf32> to vector<16x32xf32>
      %24 = arith.subf %18, %23 : vector<16x32xf32>
      %25 = arith.mulf %24, %24 : vector<16x32xf32>
      %cst_18 = arith.constant dense<0.000000e+00> : vector<16xf32>
      %26 = vector.multi_reduction <add>, %25, %cst_18 [1] : vector<16x32xf32> to vector<16xf32>
      %27 = vector.shape_cast %26 : vector<16xf32> to vector<16x1xf32>
      %cst_19 = arith.constant 3.200000e+01 : f32
      %28 = vector.broadcast %cst_19 : f32 to vector<16x1xf32>
      %29 = arith.divf %27, %28 : vector<16x1xf32>
      %30 = vector.broadcast %22 : vector<16x1xf32> to vector<16x32xf32>
      %31 = arith.subf %18, %30 : vector<16x32xf32>
      %cst_20 = arith.constant 9.99999996E-13 : f32
      %32 = vector.broadcast %cst_20 : f32 to vector<16x1xf32>
      %33 = arith.addf %29, %32 : vector<16x1xf32>
      %34 = math.rsqrt %33 : vector<16x1xf32>
      %35 = vector.broadcast %34 : vector<16x1xf32> to vector<16x32xf32>
      %36 = arith.mulf %31, %35 : vector<16x32xf32>
      %c0_21 = arith.constant 0 : index
      %c0_22 = arith.constant 0 : index
      %37 = vector.load %arg6[%c0_21, %c0_22] : memref<1x32xf32, #tpu.memory_space<vmem>>, vector<1x32xf32>
      %38 = vector.broadcast %37 : vector<1x32xf32> to vector<16x32xf32>
      %39 = arith.mulf %36, %38 : vector<16x32xf32>
      %c0_23 = arith.constant 0 : index
      %c0_24 = arith.constant 0 : index
      %40 = vector.load %arg7[%c0_23, %c0_24] : memref<1x32xf32, #tpu.memory_space<vmem>>, vector<1x32xf32>
      %41 = vector.broadcast %40 : vector<1x32xf32> to vector<16x32xf32>
      %42 = arith.addf %39, %41 : vector<16x32xf32>
      %43 = arith.truncf %42 : vector<16x32xf32> to vector<16x32xbf16>
      %c0_25 = arith.constant 0 : index
      %c0_26 = arith.constant 0 : index
      %44 = vector.load %arg8[%c0_25, %c0_26] : memref<16x32xbf16, #tpu.memory_space<vmem>>, vector<16x32xbf16>
      tpu.vector_store %arg8[%c0_25, %c0_26], %43 {strides = array<i32>} : memref<16x32xbf16, #tpu.memory_space<vmem>>, vector<16x32xbf16>,
    } else {
    }
    return
  }
  func.func @transform_0(%arg0: i32, %arg1: i32) -> (i32, i32) {
    %c0_i32 = arith.constant 0 : i32
    return %arg0, %arg1 : i32, i32
  }
  func.func @transform_1(%arg0: i32, %arg1: i32) -> (i32, i32) {
    %c0_i32 = arith.constant 0 : i32
    %c0_i32_0 = arith.constant 0 : i32
    return %arg1, %c0_i32 : i32, i32
  }
  func.func @transform_2(%arg0: i32, %arg1: i32) -> (i32, i32) {
    %c0_i32 = arith.constant 0 : i32
    %c0_i32_0 = arith.constant 0 : i32
    %c0_i32_1 = arith.constant 0 : i32
    return %c0_i32, %c0_i32_0 : i32, i32
  }
  func.func @transform_3(%arg0: i32, %arg1: i32) -> (i32, i32) {
    %c0_i32 = arith.constant 0 : i32
    %c0_i32_0 = arith.constant 0 : i32
    return %arg0, %c0_i32 : i32, i32
  }
  func.func @transform_4(%arg0: i32, %arg1: i32) -> (i32, i32) {
    %c0_i32 = arith.constant 0 : i32
    %c0_i32_0 = arith.constant 0 : i32
    %c0_i32_1 = arith.constant 0 : i32
    return %c0_i32, %c0_i32_0 : i32, i32
  }
  func.func @transform_5(%arg0: i32, %arg1: i32) -> (i32, i32) {
    %c0_i32 = arith.constant 0 : i32
    %c0_i32_0 = arith.constant 0 : i32
    %c0_i32_1 = arith.constant 0 : i32
    return %c0_i32, %c0_i32_0 : i32, i32
  }
  func.func @transform_6(%arg0: i32, %arg1: i32) -> (i32, i32) {
    %c0_i32 = arith.constant 0 : i32
    %c0_i32_0 = arith.constant 0 : i32
    return %arg0, %c0_i32 : i32, i32
  }
}

module attributes {stable_mosaic.version = 11 : i64} {
  func.func @linear_kernel(%arg0: i32, %arg1: i32, %arg2: i32, %arg3: memref<16x32xbf16, #tpu.memory_space<vmem>>, %arg4: memref<32x64xbf16, #tpu.memory_space<vmem>>, %arg5: memref<1x64xf32, #tpu.memory_space<vmem>>, %arg6: memref<16x64xbf16, #tpu.memory_space<vmem>>, %arg7: memref<16x64xf32, #tpu.memory_space<vmem>>) attributes {dimension_semantics = [#tpu.dimension_semantics<parallel>, #tpu.dimension_semantics<parallel>, #tpu.dimension_semantics<arbitrary>], iteration_bounds = array<i64: 1, 1, 1>, scalar_prefetch = 0 : i64, scratch_operands = 1 : i64, tpu.core_type = #tpu.core_type<tc>, window_params = [{transform_indices = @transform_0, window_bounds = array<i64: 16, 32>}, {transform_indices = @transform_1, window_bounds = array<i64: 32, 64>}, {transform_indices = @transform_2, window_bounds = array<i64: 1, 64>}, {transform_indices = @transform_3, window_bounds = array<i64: 16, 64>}]} {
    %c0_i32 = arith.constant 0 : i32
    %0 = arith.cmpi eq, %arg2, %c0_i32 : i32
    %1 = arith.extui %0 : i1 to i32
    %c0_i32_0 = arith.constant 0 : i32
    %2 = arith.cmpi ne, %1, %c0_i32_0 : i32
    scf.if %2 {
      %cst_10 = arith.constant 0.000000e+00 : f32
      %12 = vector.broadcast %cst_10 : f32 to vector<16x64xf32>
      %c0_11 = arith.constant 0 : index
      %c0_12 = arith.constant 0 : index
      %13 = vector.load %arg7[%c0_11, %c0_12] : memref<16x64xf32, #tpu.memory_space<vmem>>, vector<16x64xf32>
      tpu.vector_store %arg7[%c0_11, %c0_12], %12 {strides = array<i32>} : memref<16x64xf32, #tpu.memory_space<vmem>>, vector<16x64xf32>,
    } else {
    }
    %c0 = arith.constant 0 : index
    %c0_1 = arith.constant 0 : index
    %3 = vector.load %arg7[%c0, %c0_1] : memref<16x64xf32, #tpu.memory_space<vmem>>, vector<16x64xf32>
    %c0_2 = arith.constant 0 : index
    %c0_3 = arith.constant 0 : index
    %4 = vector.load %arg3[%c0_2, %c0_3] : memref<16x32xbf16, #tpu.memory_space<vmem>>, vector<16x32xbf16>
    %c0_4 = arith.constant 0 : index
    %c0_5 = arith.constant 0 : index
    %5 = vector.load %arg4[%c0_4, %c0_5] : memref<32x64xbf16, #tpu.memory_space<vmem>>, vector<32x64xbf16>
    %cst = arith.constant dense<0.000000e+00> : vector<16x64xf32>
    %6 = tpu.matmul %4, %5, %cst {dimension_numbers = #tpu.dot_dimension_numbers<[1], [0], [0], [1], [0, 0, 1, 1], [], []>} : vector<16x32xbf16>, vector<32x64xbf16>, vector<16x64xf32> -> vector<16x64xf32>
    %7 = arith.addf %3, %6 : vector<16x64xf32>
    %c0_6 = arith.constant 0 : index
    %c0_7 = arith.constant 0 : index
    %8 = vector.load %arg7[%c0_6, %c0_7] : memref<16x64xf32, #tpu.memory_space<vmem>>, vector<16x64xf32>
    tpu.vector_store %arg7[%c0_6, %c0_7], %7 {strides = array<i32>} : memref<16x64xf32, #tpu.memory_space<vmem>>, vector<16x64xf32>,
    %c0_i32_8 = arith.constant 0 : i32
    %9 = arith.cmpi eq, %arg2, %c0_i32_8 : i32
    %10 = arith.extui %9 : i1 to i32
    %c0_i32_9 = arith.constant 0 : i32
    %11 = arith.cmpi ne, %10, %c0_i32_9 : i32
    scf.if %11 {
      %c0_10 = arith.constant 0 : index
      %c0_11 = arith.constant 0 : index
      %12 = vector.load %arg7[%c0_10, %c0_11] : memref<16x64xf32, #tpu.memory_space<vmem>>, vector<16x64xf32>
      %c0_12 = arith.constant 0 : index
      %c0_13 = arith.constant 0 : index
      %13 = vector.load %arg5[%c0_12, %c0_13] : memref<1x64xf32, #tpu.memory_space<vmem>>, vector<1x64xf32>
      %14 = vector.broadcast %13 : vector<1x64xf32> to vector<16x64xf32>
      %15 = arith.addf %12, %14 : vector<16x64xf32>
      %cst_14 = arith.constant 5.000000e-01 : f32
      %16 = vector.broadcast %cst_14 : f32 to vector<16x64xf32>
      %17 = arith.mulf %16, %15 : vector<16x64xf32>
      %cst_15 = arith.constant 0.707106769 : f32
      %18 = vector.broadcast %cst_15 : f32 to vector<16x64xf32>
      %19 = arith.mulf %15, %18 : vector<16x64xf32>
      %20 = math.erf %19 : vector<16x64xf32>
      %cst_16 = arith.constant 1.000000e+00 : f32
      %21 = vector.broadcast %cst_16 : f32 to vector<16x64xf32>
      %22 = arith.addf %21, %20 : vector<16x64xf32>
      %23 = arith.mulf %17, %22 : vector<16x64xf32>
      %24 = arith.truncf %23 : vector<16x64xf32> to vector<16x64xbf16>
      %c0_17 = arith.constant 0 : index
      %c0_18 = arith.constant 0 : index
      %25 = vector.load %arg6[%c0_17, %c0_18] : memref<16x64xbf16, #tpu.memory_space<vmem>>, vector<16x64xbf16>
      tpu.vector_store %arg6[%c0_17, %c0_18], %24 {strides = array<i32>} : memref<16x64xbf16, #tpu.memory_space<vmem>>, vector<16x64xbf16>,
    } else {
    }
    return
  }
  func.func @transform_0(%arg0: i32, %arg1: i32, %arg2: i32) -> (i32, i32) {
    %c0_i32 = arith.constant 0 : i32
    return %arg0, %arg2 : i32, i32
  }
  func.func @transform_1(%arg0: i32, %arg1: i32, %arg2: i32) -> (i32, i32) {
    %c0_i32 = arith.constant 0 : i32
    return %arg2, %arg1 : i32, i32
  }
  func.func @transform_2(%arg0: i32, %arg1: i32, %arg2: i32) -> (i32, i32) {
    %c0_i32 = arith.constant 0 : i32
    %c0_i32_0 = arith.constant 0 : i32
    return %c0_i32, %arg1 : i32, i32
  }
  func.func @transform_3(%arg0: i32, %arg1: i32, %arg2: i32) -> (i32, i32) {
    %c0_i32 = arith.constant 0 : i32
    return %arg0, %arg1 : i32, i32
  }
}

module attributes {stable_mosaic.version = 11 : i64} {
  func.func @linear_kernel(%arg0: i32, %arg1: i32, %arg2: i32, %arg3: memref<2x32xbf16, #tpu.memory_space<vmem>>, %arg4: memref<32x32xbf16, #tpu.memory_space<vmem>>, %arg5: memref<1x32xf32, #tpu.memory_space<vmem>>, %arg6: memref<2x32xbf16, #tpu.memory_space<vmem>>, %arg7: memref<2x32xf32, #tpu.memory_space<vmem>>) attributes {dimension_semantics = [#tpu.dimension_semantics<parallel>, #tpu.dimension_semantics<parallel>, #tpu.dimension_semantics<arbitrary>], iteration_bounds = array<i64: 1, 1, 1>, scalar_prefetch = 0 : i64, scratch_operands = 1 : i64, tpu.core_type = #tpu.core_type<tc>, window_params = [{transform_indices = @transform_0, window_bounds = array<i64: 2, 32>}, {transform_indices = @transform_1, window_bounds = array<i64: 32, 32>}, {transform_indices = @transform_2, window_bounds = array<i64: 1, 32>}, {transform_indices = @transform_3, window_bounds = array<i64: 2, 32>}]} {
    %c0_i32 = arith.constant 0 : i32
    %0 = arith.cmpi eq, %arg2, %c0_i32 : i32
    %1 = arith.extui %0 : i1 to i32
    %c0_i32_0 = arith.constant 0 : i32
    %2 = arith.cmpi ne, %1, %c0_i32_0 : i32
    scf.if %2 {
      %cst_10 = arith.constant 0.000000e+00 : f32
      %12 = vector.broadcast %cst_10 : f32 to vector<2x32xf32>
      %c0_11 = arith.constant 0 : index
      %c0_12 = arith.constant 0 : index
      %13 = vector.load %arg7[%c0_11, %c0_12] : memref<2x32xf32, #tpu.memory_space<vmem>>, vector<2x32xf32>
      tpu.vector_store %arg7[%c0_11, %c0_12], %12 {strides = array<i32>} : memref<2x32xf32, #tpu.memory_space<vmem>>, vector<2x32xf32>,
    } else {
    }
    %c0 = arith.constant 0 : index
    %c0_1 = arith.constant 0 : index
    %3 = vector.load %arg7[%c0, %c0_1] : memref<2x32xf32, #tpu.memory_space<vmem>>, vector<2x32xf32>
    %c0_2 = arith.constant 0 : index
    %c0_3 = arith.constant 0 : index
    %4 = vector.load %arg3[%c0_2, %c0_3] : memref<2x32xbf16, #tpu.memory_space<vmem>>, vector<2x32xbf16>
    %c0_4 = arith.constant 0 : index
    %c0_5 = arith.constant 0 : index
    %5 = vector.load %arg4[%c0_4, %c0_5] : memref<32x32xbf16, #tpu.memory_space<vmem>>, vector<32x32xbf16>
    %cst = arith.constant dense<0.000000e+00> : vector<2x32xf32>
    %6 = tpu.matmul %4, %5, %cst {dimension_numbers = #tpu.dot_dimension_numbers<[1], [0], [0], [1], [0, 0, 1, 1], [], []>} : vector<2x32xbf16>, vector<32x32xbf16>, vector<2x32xf32> -> vector<2x32xf32>
    %7 = arith.addf %3, %6 : vector<2x32xf32>
    %c0_6 = arith.constant 0 : index
    %c0_7 = arith.constant 0 : index
    %8 = vector.load %arg7[%c0_6, %c0_7] : memref<2x32xf32, #tpu.memory_space<vmem>>, vector<2x32xf32>
    tpu.vector_store %arg7[%c0_6, %c0_7], %7 {strides = array<i32>} : memref<2x32xf32, #tpu.memory_space<vmem>>, vector<2x32xf32>,
    %c0_i32_8 = arith.constant 0 : i32
    %9 = arith.cmpi eq, %arg2, %c0_i32_8 : i32
    %10 = arith.extui %9 : i1 to i32
    %c0_i32_9 = arith.constant 0 : i32
    %11 = arith.cmpi ne, %10, %c0_i32_9 : i32
    scf.if %11 {
      %c0_10 = arith.constant 0 : index
      %c0_11 = arith.constant 0 : index
      %12 = vector.load %arg7[%c0_10, %c0_11] : memref<2x32xf32, #tpu.memory_space<vmem>>, vector<2x32xf32>
      %c0_12 = arith.constant 0 : index
      %c0_13 = arith.constant 0 : index
      %13 = vector.load %arg5[%c0_12, %c0_13] : memref<1x32xf32, #tpu.memory_space<vmem>>, vector<1x32xf32>
      %14 = vector.broadcast %13 : vector<1x32xf32> to vector<2x32xf32>
      %15 = arith.addf %12, %14 : vector<2x32xf32>
      %16 = math.tanh %15 : vector<2x32xf32>
      %17 = arith.truncf %16 : vector<2x32xf32> to vector<2x32xbf16>
      %c0_14 = arith.constant 0 : index
      %c0_15 = arith.constant 0 : index
      %18 = vector.load %arg6[%c0_14, %c0_15] : memref<2x32xbf16, #tpu.memory_space<vmem>>, vector<2x32xbf16>
      tpu.vector_store %arg6[%c0_14, %c0_15], %17 {strides = array<i32>} : memref<2x32xbf16, #tpu.memory_space<vmem>>, vector<2x32xbf16>,
    } else {
    }
    return
  }
  func.func @transform_0(%arg0: i32, %arg1: i32, %arg2: i32) -> (i32, i32) {
    %c0_i32 = arith.constant 0 : i32
    return %arg0, %arg2 : i32, i32
  }
  func.func @transform_1(%arg0: i32, %arg1: i32, %arg2: i32) -> (i32, i32) {
    %c0_i32 = arith.constant 0 : i32
    return %arg2, %arg1 : i32, i32
  }
  func.func @transform_2(%arg0: i32, %arg1: i32, %arg2: i32) -> (i32, i32) {
    %c0_i32 = arith.constant 0 : i32
    %c0_i32_0 = arith.constant 0 : i32
    return %c0_i32, %arg1 : i32, i32
  }
  func.func @transform_3(%arg0: i32, %arg1: i32, %arg2: i32) -> (i32, i32) {
    %c0_i32 = arith.constant 0 : i32
    return %arg0, %arg1 : i32, i32
  }
}

module attributes {stable_mosaic.version = 11 : i64} {
  func.func @linear_res_ln_kernel(%arg0: i32, %arg1: i32, %arg2: memref<16x64xbf16, #tpu.memory_space<vmem>>, %arg3: memref<64x32xbf16, #tpu.memory_space<vmem>>, %arg4: memref<1x32xf32, #tpu.memory_space<vmem>>, %arg5: memref<16x32xbf16, #tpu.memory_space<vmem>>, %arg6: memref<1x32xf32, #tpu.memory_space<vmem>>, %arg7: memref<1x32xf32, #tpu.memory_space<vmem>>, %arg8: memref<16x32xbf16, #tpu.memory_space<vmem>>, %arg9: memref<16x32xf32, #tpu.memory_space<vmem>>) attributes {dimension_semantics = [#tpu.dimension_semantics<parallel>, #tpu.dimension_semantics<arbitrary>], iteration_bounds = array<i64: 1, 1>, scalar_prefetch = 0 : i64, scratch_operands = 1 : i64, tpu.core_type = #tpu.core_type<tc>, window_params = [{transform_indices = @transform_0, window_bounds = array<i64: 16, 64>}, {transform_indices = @transform_1, window_bounds = array<i64: 64, 32>}, {pipeline_mode = #tpu.pipeline_mode<synchronous>, transform_indices = @transform_2, window_bounds = array<i64: 1, 32>}, {transform_indices = @transform_3, window_bounds = array<i64: 16, 32>}, {pipeline_mode = #tpu.pipeline_mode<synchronous>, transform_indices = @transform_4, window_bounds = array<i64: 1, 32>}, {pipeline_mode = #tpu.pipeline_mode<synchronous>, transform_indices = @transform_5, window_bounds = array<i64: 1, 32>}, {transform_indices = @transform_6, window_bounds = array<i64: 16, 32>}]} {
    %c0_i32 = arith.constant 0 : i32
    %0 = arith.cmpi eq, %arg1, %c0_i32 : i32
    %1 = arith.extui %0 : i1 to i32
    %c0_i32_0 = arith.constant 0 : i32
    %2 = arith.cmpi ne, %1, %c0_i32_0 : i32
    scf.if %2 {
      %cst_10 = arith.constant 0.000000e+00 : f32
      %12 = vector.broadcast %cst_10 : f32 to vector<16x32xf32>
      %c0_11 = arith.constant 0 : index
      %c0_12 = arith.constant 0 : index
      %13 = vector.load %arg9[%c0_11, %c0_12] : memref<16x32xf32, #tpu.memory_space<vmem>>, vector<16x32xf32>
      tpu.vector_store %arg9[%c0_11, %c0_12], %12 {strides = array<i32>} : memref<16x32xf32, #tpu.memory_space<vmem>>, vector<16x32xf32>,
    } else {
    }
    %c0 = arith.constant 0 : index
    %c0_1 = arith.constant 0 : index
    %3 = vector.load %arg9[%c0, %c0_1] : memref<16x32xf32, #tpu.memory_space<vmem>>, vector<16x32xf32>
    %c0_2 = arith.constant 0 : index
    %c0_3 = arith.constant 0 : index
    %4 = vector.load %arg2[%c0_2, %c0_3] : memref<16x64xbf16, #tpu.memory_space<vmem>>, vector<16x64xbf16>
    %c0_4 = arith.constant 0 : index
    %c0_5 = arith.constant 0 : index
    %5 = vector.load %arg3[%c0_4, %c0_5] : memref<64x32xbf16, #tpu.memory_space<vmem>>, vector<64x32xbf16>
    %cst = arith.constant dense<0.000000e+00> : vector<16x32xf32>
    %6 = tpu.matmul %4, %5, %cst {dimension_numbers = #tpu.dot_dimension_numbers<[1], [0], [0], [1], [0, 0, 1, 1], [], []>} : vector<16x64xbf16>, vector<64x32xbf16>, vector<16x32xf32> -> vector<16x32xf32>
    %7 = arith.addf %3, %6 : vector<16x32xf32>
    %c0_6 = arith.constant 0 : index
    %c0_7 = arith.constant 0 : index
    %8 = vector.load %arg9[%c0_6, %c0_7] : memref<16x32xf32, #tpu.memory_space<vmem>>, vector<16x32xf32>
    tpu.vector_store %arg9[%c0_6, %c0_7], %7 {strides = array<i32>} : memref<16x32xf32, #tpu.memory_space<vmem>>, vector<16x32xf32>,
    %c0_i32_8 = arith.constant 0 : i32
    %9 = arith.cmpi eq, %arg1, %c0_i32_8 : i32
    %10 = arith.extui %9 : i1 to i32
    %c0_i32_9 = arith.constant 0 : i32
    %11 = arith.cmpi ne, %10, %c0_i32_9 : i32
    scf.if %11 {
      %c0_10 = arith.constant 0 : index
      %c0_11 = arith.constant 0 : index
      %12 = vector.load %arg9[%c0_10, %c0_11] : memref<16x32xf32, #tpu.memory_space<vmem>>, vector<16x32xf32>
      %c0_12 = arith.constant 0 : index
      %c0_13 = arith.constant 0 : index
      %13 = vector.load %arg4[%c0_12, %c0_13] : memref<1x32xf32, #tpu.memory_space<vmem>>, vector<1x32xf32>
      %14 = vector.broadcast %13 : vector<1x32xf32> to vector<16x32xf32>
      %15 = arith.addf %12, %14 : vector<16x32xf32>
      %c0_14 = arith.constant 0 : index
      %c0_15 = arith.constant 0 : index
      %16 = vector.load %arg5[%c0_14, %c0_15] : memref<16x32xbf16, #tpu.memory_space<vmem>>, vector<16x32xbf16>
      %17 = arith.extf %16 : vector<16x32xbf16> to vector<16x32xf32>
      %18 = arith.addf %15, %17 : vector<16x32xf32>
      %cst_16 = arith.constant dense<0.000000e+00> : vector<16xf32>
      %19 = vector.multi_reduction <add>, %18, %cst_16 [1] : vector<16x32xf32> to vector<16xf32>
      %20 = vector.shape_cast %19 : vector<16xf32> to vector<16x1xf32>
      %cst_17 = arith.constant 3.200000e+01 : f32
      %21 = vector.broadcast %cst_17 : f32 to vector<16x1xf32>
      %22 = arith.divf %20, %21 : vector<16x1xf32>
      %23 = vector.broadcast %22 : vector<16x1xf32> to vector<16x32xf32>
      %24 = arith.subf %18, %23 : vector<16x32xf32>
      %25 = arith.mulf %24, %24 : vector<16x32xf32>
      %cst_18 = arith.constant dense<0.000000e+00> : vector<16xf32>
      %26 = vector.multi_reduction <add>, %25, %cst_18 [1] : vector<16x32xf32> to vector<16xf32>
      %27 = vector.shape_cast %26 : vector<16xf32> to vector<16x1xf32>
      %cst_19 = arith.constant 3.200000e+01 : f32
      %28 = vector.broadcast %cst_19 : f32 to vector<16x1xf32>
      %29 = arith.divf %27, %28 : vector<16x1xf32>
      %30 = vector.broadcast %22 : vector<16x1xf32> to vector<16x32xf32>
      %31 = arith.subf %18, %30 : vector<16x32xf32>
      %cst_20 = arith.constant 9.99999996E-13 : f32
      %32 = vector.broadcast %cst_20 : f32 to vector<16x1xf32>
      %33 = arith.addf %29, %32 : vector<16x1xf32>
      %34 = math.rsqrt %33 : vector<16x1xf32>
      %35 = vector.broadcast %34 : vector<16x1xf32> to vector<16x32xf32>
      %36 = arith.mulf %31, %35 : vector<16x32xf32>
      %c0_21 = arith.constant 0 : index
      %c0_22 = arith.constant 0 : index
      %37 = vector.load %arg6[%c0_21, %c0_22] : memref<1x32xf32, #tpu.memory_space<vmem>>, vector<1x32xf32>
      %38 = vector.broadcast %37 : vector<1x32xf32> to vector<16x32xf32>
      %39 = arith.mulf %36, %38 : vector<16x32xf32>
      %c0_23 = arith.constant 0 : index
      %c0_24 = arith.constant 0 : index
      %40 = vector.load %arg7[%c0_23, %c0_24] : memref<1x32xf32, #tpu.memory_space<vmem>>, vector<1x32xf32>
      %41 = vector.broadcast %40 : vector<1x32xf32> to vector<16x32xf32>
      %42 = arith.addf %39, %41 : vector<16x32xf32>
      %43 = arith.truncf %42 : vector<16x32xf32> to vector<16x32xbf16>
      %c0_25 = arith.constant 0 : index
      %c0_26 = arith.constant 0 : index
      %44 = vector.load %arg8[%c0_25, %c0_26] : memref<16x32xbf16, #tpu.memory_space<vmem>>, vector<16x32xbf16>
      tpu.vector_store %arg8[%c0_25, %c0_26], %43 {strides = array<i32>} : memref<16x32xbf16, #tpu.memory_space<vmem>>, vector<16x32xbf16>,
    } else {
    }
    return
  }
  func.func @transform_0(%arg0: i32, %arg1: i32) -> (i32, i32) {
    %c0_i32 = arith.constant 0 : i32
    return %arg0, %arg1 : i32, i32
  }
  func.func @transform_1(%arg0: i32, %arg1: i32) -> (i32, i32) {
    %c0_i32 = arith.constant 0 : i32
    %c0_i32_0 = arith.constant 0 : i32
    return %arg1, %c0_i32 : i32, i32
  }
  func.func @transform_2(%arg0: i32, %arg1: i32) -> (i32, i32) {
    %c0_i32 = arith.constant 0 : i32
    %c0_i32_0 = arith.constant 0 : i32
    %c0_i32_1 = arith.constant 0 : i32
    return %c0_i32, %c0_i32_0 : i32, i32
  }
  func.func @transform_3(%arg0: i32, %arg1: i32) -> (i32, i32) {
    %c0_i32 = arith.constant 0 : i32
    %c0_i32_0 = arith.constant 0 : i32
    return %arg0, %c0_i32 : i32, i32
  }
  func.func @transform_4(%arg0: i32, %arg1: i32) -> (i32, i32) {
    %c0_i32 = arith.constant 0 : i32
    %c0_i32_0 = arith.constant 0 : i32
    %c0_i32_1 = arith.constant 0 : i32
    return %c0_i32, %c0_i32_0 : i32, i32
  }
  func.func @transform_5(%arg0: i32, %arg1: i32) -> (i32, i32) {
    %c0_i32 = arith.constant 0 : i32
    %c0_i32_0 = arith.constant 0 : i32
    %c0_i32_1 = arith.constant 0 : i32
    return %c0_i32, %c0_i32_0 : i32, i32
  }
  func.func @transform_6(%arg0: i32, %arg1: i32) -> (i32, i32) {
    %c0_i32 = arith.constant 0 : i32
    %c0_i32_0 = arith.constant 0 : i32
    return %arg0, %c0_i32 : i32, i32
  }
}

</mosaic_0001>

<llo_original>
// kernel: bert_pooled_forward.12
$region0: #{bert_pooled_forward.12}
  #allocation0 [shape = 'u32[]', space=smem, size = 0x4, offset = 0x4, fixed_abs, tag = 'smem constant byte address 0x4 - core index']
  #allocation1 [shape = 'u32[144,128]{1,0:T(1,128)}', space=vmem, size = 0x12000, scoped, tag = 'internal scratch']
  %s0 = inlined_call_operand.vmem [shape: f32[16,32], index: 0, kind: input, shape index: {}]
  %s1 = inlined_call_operand.vmem [shape: f32[1,32], index: 1, kind: input, shape index: {}]
  %s2 = inlined_call_operand.vmem [shape: f32[1,32], index: 2, kind: input, shape index: {}]
  %s3 = inlined_call_operand.vmem [shape: bf16[16,32], index: 3, kind: output, shape index: {}]
  %s4 = sld [smem:[#allocation0]]
  $region22: #{bert_pooled_forward.12} parent=0
    _
  %s6 = ssub.s32 1, %s4
  %s7 = scalar_select 0, %s6, %s4
  // Predicated region
  $region2: #{bert_pooled_forward.12} parent=0 // pred_check
    _
  $region3: #{bert_pooled_forward.12} parent=0 // pred_check_branch
    %9 = sbr.rel (0) target = $region5
  $region4: #{bert_pooled_forward.12} parent=0 // pred_region
    _
  $region5: #{bert_pooled_forward.12} parent=0 // pred_fallthru
    _
  // Predicated region
  $region6: #{bert_pooled_forward.12} parent=0 // pred_check
    _
  $region7: #{bert_pooled_forward.12} parent=0 // pred_check_branch
    %11 = sbr.rel (0) target = $region9
  $region8: #{bert_pooled_forward.12} parent=0 // pred_region
    _
  $region9: #{bert_pooled_forward.12} parent=0 // pred_fallthru
    _
  // Predicated region
  $region10: #{bert_pooled_forward.12} parent=0 // pred_check
    _
  $region11: #{bert_pooled_forward.12} parent=0 // pred_check_branch
    %13 = sbr.rel (0) target = $region13
  $region12: #{bert_pooled_forward.12} parent=0 // pred_region
    _
  $region13: #{bert_pooled_forward.12} parent=0 // pred_fallthru
    _
  %v14 = vld [vmem:[%s0] sm:$0xff]
  %v15 = vld [vmem:[%s0 + $0x8] sm:$0xff]
  %vm16 = vcmask 261120
  %v17 = vsel %vm16, %v14, 0.0
  %18 = vadd.xlane.f32.xlu0 %v17
  %v19 = vpop.xlane.xlu0 %18
  %v20 = vsel %vm16, %v15, 0.0
  %21 = vadd.xlane.f32.xlu0 %v20
  %v22 = vpop.xlane.xlu0 %21
  %v23 = vrcp.pop 32.0
  %v24 = vmul.f32 %v19, %v23
  %v25 = vmul.f32 %v22, %v23
  %v26 = vsub.f32 %v14, %v24
  %v27 = vsub.f32 %v15, %v25
  %v28 = vmul.f32 %v26, %v26
  %v29 = vmul.f32 %v27, %v27
  %v30 = vsel %vm16, %v28, 0.0
  %31 = vadd.xlane.f32.xlu0 %v30
  %v32 = vpop.xlane.xlu0 %31
  %v33 = vsel %vm16, %v29, 0.0
  %34 = vadd.xlane.f32.xlu0 %v33
  %v35 = vpop.xlane.xlu0 %34
  %v36 = vmul.f32 %v32, %v23
  %v37 = vmul.f32 %v35, %v23
  %v38 = vadd.f32 %v36, 1e-12
  %v39 = vadd.f32 %v37, 1e-12
  %v40 = vrsqrt.pop %v38
  %v41 = vrsqrt.pop %v39
  %v42 = vmul.f32 %v26, %v40
  %v43 = vmul.f32 %v27, %v41
  %v44 = vld [vmem:[%s1] sm:$0x1]
  %v46 = vlaneseq
  %v47 = vshrl.u32 %v46, 7
  %v48 = vsub.s32 0, %v47
  %v49 = vrot.slane %v44, %v48
  %v51 = vmul.f32 %v42, %v49
  %v52 = vmul.f32 %v43, %v49
  %v53 = vld [vmem:[%s2] sm:$0x1]
  %v55 = vlaneseq
  %v56 = vshrl.u32 %v55, 7
  %v57 = vsub.s32 0, %v56
  %v58 = vrot.slane %v53, %v57
  %v60 = vadd.f32 %v51, %v58
  %v61 = vadd.f32 %v52, %v58
  %v62 = vpack.c.bf16 %v61, %v60
  %v64 = vunpack.c.l.b16 %v62
  %v65 = vunpack.c.h.b16 %v62
  %v66 = vpack.c.b16 %v64, %v64
  %v67 = vpack.c.b16 %v65, %v65
  %vm70 = vcmask 257024
  %71 = vst.msk [vmem:[%s3] sm:$0xf] %vm70, %v66
  %72 = vst.msk [vmem:[%s3 + $0x4] sm:$0xf] %vm70, %v67
  // Predicated region
  $region14: #{bert_pooled_forward.12} parent=0 // pred_check
    _
  $region15: #{bert_pooled_forward.12} parent=0 // pred_check_branch
    %74 = sbr.rel (0) target = $region17
  $region16: #{bert_pooled_forward.12} parent=0 // pred_region
    _
  $region17: #{bert_pooled_forward.12} parent=0 // pred_fallthru
    _
  // Predicated region
  $region18: #{bert_pooled_forward.12} parent=0 // pred_check
    _
  $region19: #{bert_pooled_forward.12} parent=0 // pred_check_branch
    %76 = sbr.rel (0) target = $region21
  $region20: #{bert_pooled_forward.12} parent=0 // pred_region
    _
  $region21: #{bert_pooled_forward.12} parent=0 // pred_fallthru
    _

// kernel: bert_pooled_forward.13
$region0: #{bert_pooled_forward.13}
  #allocation0 [shape = 'u32[]', space=smem, size = 0x4, offset = 0x4, fixed_abs, tag = 'smem constant byte address 0x4 - core index']
  #allocation1 [shape = 'u32[144,128]{1,0:T(1,128)}', space=vmem, size = 0x12000, scoped, tag = 'internal scratch']
  #allocation2 [shape = 'f32[16,96]{1,0:T(8,128)}', space=vmem, size = 0x2000, scoped, tag = 'scratch operand']
  %s0 = inlined_call_operand.vmem [shape: bf16[16,32], index: 0, kind: input, shape index: {}]
  %s1 = inlined_call_operand.vmem [shape: bf16[32,96], index: 1, kind: input, shape index: {}]
  %s2 = inlined_call_operand.vmem [shape: f32[1,96], index: 2, kind: input, shape index: {}]
  %s3 = inlined_call_operand.vmem [shape: bf16[16,96], index: 3, kind: output, shape index: {}]
  %s4 = sld [smem:[#allocation0]]
  $region30: #{bert_pooled_forward.13} parent=0
    _
  %s6 = ssub.s32 1, %s4
  %s7 = scalar_select 0, %s6, %s4
  // Predicated region
  $region2: #{bert_pooled_forward.13} parent=0 // pred_check
    _
  $region3: #{bert_pooled_forward.13} parent=0 // pred_check_branch
    %9 = sbr.rel (0) target = $region5
  $region4: #{bert_pooled_forward.13} parent=0 // pred_region
    _
  $region5: #{bert_pooled_forward.13} parent=0 // pred_fallthru
    _
  // Predicated region
  $region6: #{bert_pooled_forward.13} parent=0 // pred_check
    _
  $region7: #{bert_pooled_forward.13} parent=0 // pred_check_branch
    %11 = sbr.rel (0) target = $region9
  $region8: #{bert_pooled_forward.13} parent=0 // pred_region
    _
  $region9: #{bert_pooled_forward.13} parent=0 // pred_fallthru
    _
  // Predicated region
  $region10: #{bert_pooled_forward.13} parent=0 // pred_check
    _
  $region11: #{bert_pooled_forward.13} parent=0 // pred_check_branch
    %13 = sbr.rel (0) target = $region13
  $region12: #{bert_pooled_forward.13} parent=0 // pred_region
    _
  $region13: #{bert_pooled_forward.13} parent=0 // pred_fallthru
    _
  %p15 = scmp.eq.s32.totalorder 0, 0
  // Predicated region
  $region14: #{bert_pooled_forward.13} parent=0 // pred_check
    %p16 = pneg %p15
  $region15: #{bert_pooled_forward.13} parent=0 // pred_check_branch
    %18 = sbr.rel (%p16) target = $region17
  $region16: #{bert_pooled_forward.13} parent=0 // pred_region
    %vm19 = vcmask 785408
    %20 = vst.msk [vmem:[#allocation2] sm:$0xff] %vm19, 0.0
    %21 = vst.msk [vmem:[#allocation2 + $0x8] sm:$0xff] %vm19, 0.0
  $region17: #{bert_pooled_forward.13} parent=0 // pred_fallthru
    _
  %v22 = vld [vmem:[#allocation2] sm:$0xff]
  %v23 = vld [vmem:[#allocation2 + $0x8] sm:$0xff]
  %v24 = vld [vmem:[%s0] sm:$0xf]
  %v25 = vld [vmem:[%s0 + $0x4] sm:$0xf]
  %v26 = vld [vmem:[%s1] sm:$0xf]
  %v27 = vld [vmem:[%s1 + $0x4] sm:$0xf]
  %v28 = vld [vmem:[%s1 + $0x8] sm:$0xf]
  %v29 = vld [vmem:[%s1 + $0xc] sm:$0xf]
  %v32 = vunpack.c.l.b16 %v24
  %v33 = vunpack.c.l.b16 %v25
  %v34 = vpack.c.b16 %v33, %v32
  %v39 = vunpack.c.l.b16 %v26
  %v40 = vunpack.c.l.b16 %v27
  %v41 = vunpack.c.l.b16 %v28
  %v42 = vunpack.c.l.b16 %v29
  %v43 = vpack.c.b16 %v40, %v39
  %v44 = vpack.c.b16 %v42, %v41
  %vm47 = vcmask 261120
  %v49 = vsel %vm47, %v34, 0
  %51 = vmatprep.subr.bf16.mxu0 0
  %52 = vmatpush1.bf16.msra.mxu0 %v43
  %53 = vmatprep.subr.bf16.mxu0 0
  %54 = vmatpush1.bf16.msra.mxu0 %v44
  %55 = vmatprep.subr.bf16.mxu0 0
  %56 = vmatpush1.bf16.msra.mxu0 0
  %57 = vmatprep.subr.bf16.mxu0 0
  %58 = vmatpush1.bf16.msra.mxu0 0
  %59 = vmatprep.subr.bf16.mxu0 0
  %60 = vmatpush1.bf16.msra.mxu0 0
  %61 = vmatprep.subr.bf16.mxu0 0
  %62 = vmatpush1.bf16.msra.mxu0 0
  %63 = vmatprep.subr.bf16.mxu0 0
  %64 = vmatpush1.bf16.msra.mxu0 0
  %65 = vmatprep.subr.bf16.mxu0 0
  %66 = vmatpush1.bf16.msra.mxu0 0
  %67 = vmatprep.subr.bf16.mxu0 0
  %68 = vmatpush1.bf16.msra.mxu0 0
  %69 = vmatprep.subr.bf16.mxu0 0
  %70 = vmatpush1.bf16.msra.mxu0 0
  %71 = vmatprep.subr.bf16.mxu0 0
  %72 = vmatpush1.bf16.msra.mxu0 0
  %73 = vmatprep.subr.bf16.mxu0 0
  %74 = vmatpush1.bf16.msra.mxu0 0
  %75 = vmatprep.subr.bf16.mxu0 0
  %76 = vmatpush1.bf16.msra.mxu0 0
  %77 = vmatprep.subr.bf16.mxu0 0
  %78 = vmatpush1.bf16.msra.mxu0 0
  %79 = vmatprep.subr.bf16.mxu0 0
  %80 = vmatpush1.bf16.msra.mxu0 0
  %81 = vmatprep.subr.bf16.mxu0 0
  %82 = vmatpush1.bf16.msra.mxu0 0
  %83 = vmatprep.mubr.bf16.mxu0 0
  %84 = vmatmul.mubr.bf16.gmra.mrb[0].mxu0 %v49
  %v85 = vpop.f32.mrb[0].mxu0
  %v86 = vadd.f32 0.0, %v85
  %v87 = vpop.f32.mrb[0].mxu0
  %v88 = vpop.f32.mrb[0].mxu0
  %v89 = vadd.f32 0.0, %v88
  %v90 = vpop.f32.mrb[0].mxu0
  %91 = vdwg.mxu0
  %v92 = vadd.f32 %v22, %v86
  %v93 = vadd.f32 %v23, %v89
  %vm94 = vcmask 785408
  %95 = vst.msk [vmem:[#allocation2] sm:$0xff] %vm94, %v92
  %96 = vst.msk [vmem:[#allocation2 + $0x8] sm:$0xff] %vm94, %v93
  // Predicated region
  $region18: #{bert_pooled_forward.13} parent=0 // pred_check
    %p97 = pneg %p15
  $region19: #{bert_pooled_forward.13} parent=0 // pred_check_branch
    %99 = sbr.rel (%p97) target = $region21
  $region20: #{bert_pooled_forward.13} parent=0 // pred_region
    %v100 = vld [vmem:[#allocation2] sm:$0xff]
    %v101 = vld [vmem:[#allocation2 + $0x8] sm:$0xff]
    %v102 = vld [vmem:[%s2] sm:$0x1]
    %v104 = vlaneseq
    %v105 = vshrl.u32 %v104, 7
    %v106 = vsub.s32 0, %v105
    %v107 = vrot.slane %v102, %v106
    %v109 = vadd.f32 %v100, %v107
    %v110 = vadd.f32 %v101, %v107
    %v111 = vpack.c.bf16 %v110, %v109
    %v113 = vunpack.c.l.b16 %v111
    %v114 = vunpack.c.h.b16 %v111
    %v115 = vpack.c.b16 %v113, %v113
    %v116 = vpack.c.b16 %v114, %v114
    %vm119 = vcmask 781312
    %120 = vst.msk [vmem:[%s3] sm:$0xf] %vm119, %v115
    %121 = vst.msk [vmem:[%s3 + $0x4] sm:$0xf] %vm119, %v116
  $region21: #{bert_pooled_forward.13} parent=0 // pred_fallthru
    _
  // Predicated region
  $region22: #{bert_pooled_forward.13} parent=0 // pred_check
    _
  $region23: #{bert_pooled_forward.13} parent=0 // pred_check_branch
    %123 = sbr.rel (0) target = $region25
  $region24: #{bert_pooled_forward.13} parent=0 // pred_region
    _
  $region25: #{bert_pooled_forward.13} parent=0 // pred_fallthru
    _
  // Predicated region
  $region26: #{bert_pooled_forward.13} parent=0 // pred_check
    _
  $region27: #{bert_pooled_forward.13} parent=0 // pred_check_branch
    %125 = sbr.rel (0) target = $region29
  $region28: #{bert_pooled_forward.13} parent=0 // pred_region
    _
  $region29: #{bert_pooled_forward.13} parent=0 // pred_fallthru
    _

// kernel: bert_pooled_forward.14
$region0: #{bert_pooled_forward.14}
  #allocation0 [shape = 'u32[]', space=smem, size = 0x4, offset = 0x4, fixed_abs, tag = 'smem constant byte address 0x4 - core index']
  #allocation1 [shape = 'u32[144,128]{1,0:T(1,128)}', space=vmem, size = 0x12000, scoped, tag = 'internal scratch']
  %s0 = inlined_call_operand.vmem [shape: bf16[2,3,4,8,8], index: 0, kind: input, shape index: {}, may-alias: {0,1,2}]
  %s1 = inlined_call_operand.vmem [shape: bf16[2,3,4,8,8], index: 1, kind: input, shape index: {}, may-alias: {0,1,2}]
  %s2 = inlined_call_operand.vmem [shape: bf16[2,3,4,8,8], index: 2, kind: input, shape index: {}, may-alias: {0,1,2}]
  %s3 = inlined_call_operand.vmem [shape: f32[2,1,8], index: 3, kind: input, shape index: {}]
  %s4 = inlined_call_operand.vmem [shape: bf16[2,4,8,8], index: 4, kind: output, shape index: {}]
  %s5 = sld [smem:[#allocation0]]
  $region49: #{bert_pooled_forward.14} parent=0
    _
  %s7 = ssub.s32 1, %s5
  %s8 = scalar_select 0, %s7, %s5
  loop: start=0, step=1, limit=4
  $region2: #{bert_pooled_forward.14} parent=0 // loop_pre_header
    _
  $region3: #{bert_pooled_forward.14} parent=0 // loop_header
    %s10 = sphi 0, %s14
    %p11 = scmp.ge.s32.totalorder %s10, 4
    %s17 = sphi 0, %s29
    %s18 = sphi 0, %s25
    %s19 = sphi 0, %s17
    %s20 = sphi 0, %s18
    %s21 = sphi 0, %s19
    %s22 = sphi 0, %s20
    %s34 = sphi 0, %s36
    %s37 = sphi 0, %s34
    %s38 = sphi 0, %s37
    %s54 = sphi 0, %s38
    %s60 = sphi 0, %s62
    %s63 = sphi 0, %s60
    %s64 = sphi 0, %s63
    %s80 = sphi 0, %s64
    %s86 = sphi 0, %s88
    %s89 = sphi 0, %s86
    %s90 = sphi 0, %s89
    %s106 = sphi 0, %s90
    %s112 = sphi 0, %s114
    %s115 = sphi 0, %s112
    %s116 = sphi 0, %s115
    %s132 = sphi 0, %s116
    %s140 = sphi 0, %s142
    %s143 = sphi 0, %s140
    %s144 = sphi 0, %s143
    %s160 = sphi 0, %s144
  $region4: #{bert_pooled_forward.14} parent=0 // loop_header_branch
    %13 = sbr.rel (%p11) target = $region8
  $region5: #{bert_pooled_forward.14} parent=0 // loop_body
    %s15 = ssub.s32 %s10, 1
    %s16 = ssub.s32 %s10, 2
    %s23 = sadd.s32 1, %s18
    %p24 = scmp.ge.s32.totalorder %s23, 1
    %s25 = scalar_select %p24, 0, %s23
    %s26 = sadd.s32 1, %s17
    %s27 = scalar_select %p24, %s26, %s17
    %p28 = scmp.ge.s32.totalorder %s27, 2
    %s29 = scalar_select %p28, 0, %s27
    %s30 = ssub.s32 %s17, %s29
    %s31 = ssub.s32 %s18, %s25
    %s32 = sor.u32 %s30, %s31
    %p33 = scmp.eq.s32.totalorder %s32, 0
    %s35 = sadd.s32 %s34, 1
    %s36 = scalar_select %p33, %s34, %s35
    %p39 = pneg %p33
    %p40 = scmp.eq.s32.totalorder %s10, 1
    %p41 = por %p39, %p40
    %p42 = scmp.ne.s32.totalorder %s34, %s37
    %p43 = scmp.eq.s32.totalorder %s10, 0
    %p44 = por %p42, %p43
    %p45 = scmp.ne.s32.totalorder %s34, %s37
    %p46 = scmp.eq.s32.totalorder %s15, 1
    %p47 = por %p45, %p46
    %p48 = scmp.ne.s32.totalorder %s37, %s38
    %p49 = scmp.eq.s32.totalorder %s15, 0
    %p50 = por %p48, %p49
    %p51 = scmp.ne.s32.totalorder %s37, %s38
    %p52 = scmp.eq.s32.totalorder %s16, 1
    %p53 = por %p51, %p52
    %p55 = scmp.ne.s32.totalorder %s38, %s54
    %p56 = scmp.eq.s32.totalorder %s16, 0
    %p57 = por %p55, %p56
    %s58 = ssub.s32 %s17, %s29
    %p59 = scmp.eq.s32.totalorder %s58, 0
    %s61 = sadd.s32 %s60, 1
    %s62 = scalar_select %p59, %s60, %s61
    %p65 = pneg %p59
    %p66 = scmp.eq.s32.totalorder %s10, 1
    %p67 = por %p65, %p66
    %p68 = scmp.ne.s32.totalorder %s60, %s63
    %p69 = scmp.eq.s32.totalorder %s10, 0
    %p70 = por %p68, %p69
    %p71 = scmp.ne.s32.totalorder %s60, %s63
    %p72 = scmp.eq.s32.totalorder %s15, 1
    %p73 = por %p71, %p72
    %p74 = scmp.ne.s32.totalorder %s63, %s64
    %p75 = scmp.eq.s32.totalorder %s15, 0
    %p76 = por %p74, %p75
    %p77 = scmp.ne.s32.totalorder %s63, %s64
    %p78 = scmp.eq.s32.totalorder %s16, 1
    %p79 = por %p77, %p78
    %p81 = scmp.ne.s32.totalorder %s64, %s80
    %p82 = scmp.eq.s32.totalorder %s16, 0
    %p83 = por %p81, %p82
    %s84 = ssub.s32 %s17, %s29
    %p85 = scmp.eq.s32.totalorder %s84, 0
    %s87 = sadd.s32 %s86, 1
    %s88 = scalar_select %p85, %s86, %s87
    %p91 = pneg %p85
    %p92 = scmp.eq.s32.totalorder %s10, 1
    %p93 = por %p91, %p92
    %p94 = scmp.ne.s32.totalorder %s86, %s89
    %p95 = scmp.eq.s32.totalorder %s10, 0
    %p96 = por %p94, %p95
    %p97 = scmp.ne.s32.totalorder %s86, %s89
    %p98 = scmp.eq.s32.totalorder %s15, 1
    %p99 = por %p97, %p98
    %p100 = scmp.ne.s32.totalorder %s89, %s90
    %p101 = scmp.eq.s32.totalorder %s15, 0
    %p102 = por %p100, %p101
    %p103 = scmp.ne.s32.totalorder %s89, %s90
    %p104 = scmp.eq.s32.totalorder %s16, 1
    %p105 = por %p103, %p104
    %p107 = scmp.ne.s32.totalorder %s90, %s106
    %p108 = scmp.eq.s32.totalorder %s16, 0
    %p109 = por %p107, %p108
    %s110 = ssub.s32 %s17, %s29
    %p111 = scmp.eq.s32.totalorder %s110, 0
    %s113 = sadd.s32 %s112, 1
    %s114 = scalar_select %p111, %s112, %s113
    %p117 = pneg %p111
    %p118 = scmp.eq.s32.totalorder %s10, 1
    %p119 = por %p117, %p118
    %p120 = scmp.ne.s32.totalorder %s112, %s115
    %p121 = scmp.eq.s32.totalorder %s10, 0
    %p122 = por %p120, %p121
    %p123 = scmp.ne.s32.totalorder %s112, %s115
    %p124 = scmp.eq.s32.totalorder %s15, 1
    %p125 = por %p123, %p124
    %p126 = scmp.ne.s32.totalorder %s115, %s116
    %p127 = scmp.eq.s32.totalorder %s15, 0
    %p128 = por %p126, %p127
    %p129 = scmp.ne.s32.totalorder %s115, %s116
    %p130 = scmp.eq.s32.totalorder %s16, 1
    %p131 = por %p129, %p130
    %p133 = scmp.ne.s32.totalorder %s116, %s132
    %p134 = scmp.eq.s32.totalorder %s16, 0
    %p135 = por %p133, %p134
    %s136 = ssub.s32 %s17, %s29
    %s137 = ssub.s32 %s18, %s25
    %s138 = sor.u32 %s136, %s137
    %p139 = scmp.eq.s32.totalorder %s138, 0
    %s141 = sadd.s32 %s140, 1
    %s142 = scalar_select %p139, %s140, %s141
    %p145 = pneg %p139
    %p146 = scmp.eq.s32.totalorder %s10, 1
    %p147 = por %p145, %p146
    %p148 = scmp.ne.s32.totalorder %s140, %s143
    %p149 = scmp.eq.s32.totalorder %s10, 0
    %p150 = por %p148, %p149
    %p151 = scmp.ne.s32.totalorder %s140, %s143
    %p152 = scmp.eq.s32.totalorder %s15, 1
    %p153 = por %p151, %p152
    %p154 = scmp.ne.s32.totalorder %s143, %s144
    %p155 = scmp.eq.s32.totalorder %s15, 0
    %p156 = por %p154, %p155
    %p157 = scmp.ne.s32.totalorder %s143, %s144
    %p158 = scmp.eq.s32.totalorder %s16, 1
    %p159 = por %p157, %p158
    %p161 = scmp.ne.s32.totalorder %s144, %s160
    %p162 = scmp.eq.s32.totalorder %s16, 0
    %p163 = por %p161, %p162
    %p164 = scmp.le.s32.totalorder 1, %s10
    %p165 = scmp.lt.s32.totalorder %s10, 3
    %p166 = pnand %p164, %p165
    %p167 = pneg %p166
    // Predicated region
    $region9: #{bert_pooled_forward.14} parent=5 // pred_check
      _
    $region10: #{bert_pooled_forward.14} parent=5 // pred_check_branch
      %169 = sbr.rel (%p166) target = $region12
    $region11: #{bert_pooled_forward.14} parent=5 // pred_region
      %s170 = ssub.s32 %s10, 1
    $region12: #{bert_pooled_forward.14} parent=5 // pred_fallthru
      _
    %p171 = scmp.lt.s32.totalorder %s10, 2
    // Predicated region
    $region13: #{bert_pooled_forward.14} parent=5 // pred_check
      %p172 = pneg %p171
    $region14: #{bert_pooled_forward.14} parent=5 // pred_check_branch
      %174 = sbr.rel (%p172) target = $region16
    $region15: #{bert_pooled_forward.14} parent=5 // pred_region
      // Predicated region
      $region17: #{bert_pooled_forward.14} parent=15 // pred_check
        %p175 = pneg %p44
      $region18: #{bert_pooled_forward.14} parent=15 // pred_check_branch
        %177 = sbr.rel (%p175) target = $region20
      $region19: #{bert_pooled_forward.14} parent=15 // pred_region
        %p178 = scmp.lt.s32.totalorder %s17, 1
        %s179 = scalar_select %p178, %s17, 1
        %p180 = scmp.lt.s32.totalorder %s18, 0
        %s181 = scalar_select %p180, %s18, 0
        %s182 = smul.addr %s179, 12
        %s183 = sadd.s32 %s181, %s182
        %s184 = smul.addr %s183, 4
        %s185 = scalar_lea.vmem %s0, %s184
      $region20: #{bert_pooled_forward.14} parent=15 // pred_fallthru
        _
      // Predicated region
      $region21: #{bert_pooled_forward.14} parent=15 // pred_check
        %p186 = pneg %p70
      $region22: #{bert_pooled_forward.14} parent=15 // pred_check_branch
        %188 = sbr.rel (%p186) target = $region24
      $region23: #{bert_pooled_forward.14} parent=15 // pred_region
        %p189 = scmp.lt.s32.totalorder %s17, 1
        %s190 = scalar_select %p189, %s17, 1
        %s191 = smul.addr %s190, 12
        %s192 = sadd.s32 4, %s191
        %s193 = smul.addr %s192, 4
        %s194 = scalar_lea.vmem %s1, %s193
      $region24: #{bert_pooled_forward.14} parent=15 // pred_fallthru
        _
      // Predicated region
      $region25: #{bert_pooled_forward.14} parent=15 // pred_check
        %p195 = pneg %p96
      $region26: #{bert_pooled_forward.14} parent=15 // pred_check_branch
        %197 = sbr.rel (%p195) target = $region28
      $region27: #{bert_pooled_forward.14} parent=15 // pred_region
        %p198 = scmp.lt.s32.totalorder %s17, 1
        %s199 = scalar_select %p198, %s17, 1
        %s200 = smul.addr %s199, 12
        %s201 = sadd.s32 8, %s200
        %s202 = smul.addr %s201, 4
        %s203 = scalar_lea.vmem %s2, %s202
      $region28: #{bert_pooled_forward.14} parent=15 // pred_fallthru
        _
      // Predicated region
      $region29: #{bert_pooled_forward.14} parent=15 // pred_check
        %p204 = pneg %p122
      $region30: #{bert_pooled_forward.14} parent=15 // pred_check_branch
        %206 = sbr.rel (%p204) target = $region32
      $region31: #{bert_pooled_forward.14} parent=15 // pred_region
        %p207 = scmp.lt.s32.totalorder %s17, 1
        %s208 = scalar_select %p207, %s17, 1
        %s209 = scalar_lea.vmem %s3, %s208
      $region32: #{bert_pooled_forward.14} parent=15 // pred_fallthru
        _
    $region16: #{bert_pooled_forward.14} parent=5 // pred_fallthru
      _
    %p210 = scmp.le.s32.totalorder 1, %s10
    %p211 = scmp.lt.s32.totalorder %s10, 3
    %p212 = pnand %p210, %p211
    %p213 = pneg %p212
    // Predicated region
    $region33: #{bert_pooled_forward.14} parent=5 // pred_check
      _
    $region34: #{bert_pooled_forward.14} parent=5 // pred_check_branch
      %215 = sbr.rel (%p212) target = $region36
    $region35: #{bert_pooled_forward.14} parent=5 // pred_region
      %s216 = ssub.s32 %s10, 1
      %p217 = scmp.lt.s32.totalorder %s19, 1
      %s218 = scalar_select %p217, %s19, 1
      %p219 = scmp.lt.s32.totalorder %s20, 0
      %s220 = scalar_select %p219, %s20, 0
      %s221 = smul.addr %s218, 12
      %s222 = sadd.s32 %s220, %s221
      %s223 = smul.addr %s222, 4
      %s224 = scalar_lea.vmem %s0, %s223
      %p225 = pneg %p50
      %p226 = pneg %p47
      %p227 = scmp.lt.s32.totalorder %s19, 1
      %s228 = scalar_select %p227, %s19, 1
      %s229 = smul.addr %s228, 12
      %s230 = sadd.s32 4, %s229
      %s231 = smul.addr %s230, 4
      %s232 = scalar_lea.vmem %s1, %s231
      %p233 = pneg %p76
      %p234 = pneg %p73
      %p235 = scmp.lt.s32.totalorder %s19, 1
      %s236 = scalar_select %p235, %s19, 1
      %s237 = smul.addr %s236, 12
      %s238 = sadd.s32 8, %s237
      %s239 = smul.addr %s238, 4
      %s240 = scalar_lea.vmem %s2, %s239
      %p241 = pneg %p102
      %p242 = pneg %p99
      %p243 = scmp.lt.s32.totalorder %s19, 1
      %s244 = scalar_select %p243, %s19, 1
      %s245 = scalar_lea.vmem %s3, %s244
      %p246 = pneg %p128
      %p247 = pneg %p125
      %p248 = pneg %p156
      %p249 = pneg %p153
      %p250 = scmp.lt.s32.totalorder %s19, 1
      %s251 = scalar_select %p250, %s19, 1
      %p252 = scmp.lt.s32.totalorder %s20, 0
      %s253 = scalar_select %p252, %s20, 0
      %s254 = smul.addr %s251, 4
      %s255 = sadd.s32 %s253, %s254
      %s256 = smul.addr %s255, 4
      %s257 = scalar_lea.vmem %s4, %s256
      %p258 = scmp.lt.s32.totalorder %s19, 1
      %s259 = scalar_select %p258, %s19, 1
      %p260 = scmp.lt.s32.totalorder %s20, 0
      %s261 = scalar_select %p260, %s20, 0
      %s262 = smul.addr %s259, 12
      %s263 = sadd.s32 %s261, %s262
      %s264 = smul.addr %s263, 4
      %s265 = scalar_lea.vmem %s0, %s264
      %p266 = scmp.lt.s32.totalorder %s19, 1
      %s267 = scalar_select %p266, %s19, 1
      %s268 = smul.addr %s267, 12
      %s269 = sadd.s32 4, %s268
      %s270 = smul.addr %s269, 4
      %s271 = scalar_lea.vmem %s1, %s270
      %p272 = scmp.lt.s32.totalorder %s19, 1
      %s273 = scalar_select %p272, %s19, 1
      %s274 = smul.addr %s273, 12
      %s275 = sadd.s32 8, %s274
      %s276 = smul.addr %s275, 4
      %s277 = scalar_lea.vmem %s2, %s276
      %p278 = scmp.lt.s32.totalorder %s19, 1
      %s279 = scalar_select %p278, %s19, 1
      %s280 = scalar_lea.vmem %s3, %s279
      %p281 = scmp.lt.s32.totalorder %s19, 1
      %s282 = scalar_select %p281, %s19, 1
      %p283 = scmp.lt.s32.totalorder %s20, 0
      %s284 = scalar_select %p283, %s20, 0
      %s285 = smul.addr %s282, 4
      %s286 = sadd.s32 %s284, %s285
      %s287 = smul.addr %s286, 4
      %s288 = scalar_lea.vmem %s4, %s287
      %v290 = vld [vmem:[%s265] sm:$0xf]
      %v291 = vld [vmem:[%s265 + $0x4] sm:$0xf]
      %v292 = vld [vmem:[%s265 + $0x8] sm:$0xf]
      %v293 = vld [vmem:[%s265 + $0xc] sm:$0xf]
      %v294 = vld [vmem:[%s271] sm:$0xf]
      %v295 = vld [vmem:[%s271 + $0x4] sm:$0xf]
      %v296 = vld [vmem:[%s271 + $0x8] sm:$0xf]
      %v297 = vld [vmem:[%s271 + $0xc] sm:$0xf]
      %v298 = vld [vmem:[%s277] sm:$0xf]
      %v299 = vld [vmem:[%s277 + $0x4] sm:$0xf]
      %v300 = vld [vmem:[%s277 + $0x8] sm:$0xf]
      %v301 = vld [vmem:[%s277 + $0xc] sm:$0xf]
      %v302 = vld [vmem:[%s280] sm:$0x1]
      %vm303 = vcmask 64512
      %v305 = vsel %vm303, %v290, 0
      %v308 = vsel %vm303, %v294, 0
      %310 = vmatprep.subr.bf16.mxu0 0
      %311 = vmatpush1.bf16.xpose.msra.mxu0 %v308
      %312 = vmatprep.subr.bf16.mxu0 0
      %313 = vmatpush1.bf16.xpose.msra.mxu0 0
      %314 = vmatprep.subr.bf16.mxu0 0
      %315 = vmatpush1.bf16.xpose.msra.mxu0 0
      %316 = vmatprep.subr.bf16.mxu0 0
      %317 = vmatpush1.bf16.xpose.msra.mxu0 0
      %318 = vmatprep.subr.bf16.mxu0 0
      %319 = vmatpush1.bf16.xpose.msra.mxu0 0
      %320 = vmatprep.subr.bf16.mxu0 0
      %321 = vmatpush1.bf16.xpose.msra.mxu0 0
      %322 = vmatprep.subr.bf16.mxu0 0
      %323 = vmatpush1.bf16.xpose.msra.mxu0 0
      %324 = vmatprep.subr.bf16.mxu0 0
      %325 = vmatpush1.bf16.xpose.msra.mxu0 0
      %326 = vmatprep.subr.bf16.mxu0 0
      %327 = vmatpush1.bf16.xpose.msra.mxu0 0
      %328 = vmatprep.subr.bf16.mxu0 0
      %329 = vmatpush1.bf16.xpose.msra.mxu0 0
      %330 = vmatprep.subr.bf16.mxu0 0
      %331 = vmatpush1.bf16.xpose.msra.mxu0 0
      %332 = vmatprep.subr.bf16.mxu0 0
      %333 = vmatpush1.bf16.xpose.msra.mxu0 0
      %334 = vmatprep.subr.bf16.mxu0 0
      %335 = vmatpush1.bf16.xpose.msra.mxu0 0
      %336 = vmatprep.subr.bf16.mxu0 0
      %337 = vmatpush1.bf16.xpose.msra.mxu0 0
      %338 = vmatprep.subr.bf16.mxu0 0
      %339 = vmatpush1.bf16.xpose.msra.mxu0 0
      %340 = vmatprep.subr.bf16.mxu0 0
      %341 = vmatpush1.bf16.xpose.msra.mxu0 0
      %342 = vmatprep.mubr.bf16.mxu0 0
      %343 = vmatmul.mubr.bf16.gmra.mrb[0].mxu0 %v305
      %v344 = vpop.f32.mrb[0].mxu0
      %v345 = vadd.f32 0.0, %v344
      %v346 = vpop.f32.mrb[0].mxu0
      %v347 = vpop.f32.mrb[0].mxu0
      %v348 = vpop.f32.mrb[0].mxu0
      %349 = vdwg.mxu0
      %v351 = vsel %vm303, %v291, 0
      %v354 = vsel %vm303, %v295, 0
      %356 = vmatprep.subr.bf16.mxu0 0
      %357 = vmatpush1.bf16.xpose.msra.mxu0 %v354
      %358 = vmatprep.subr.bf16.mxu0 0
      %359 = vmatpush1.bf16.xpose.msra.mxu0 0
      %360 = vmatprep.subr.bf16.mxu0 0
      %361 = vmatpush1.bf16.xpose.msra.mxu0 0
      %362 = vmatprep.subr.bf16.mxu0 0
      %363 = vmatpush1.bf16.xpose.msra.mxu0 0
      %364 = vmatprep.subr.bf16.mxu0 0
      %365 = vmatpush1.bf16.xpose.msra.mxu0 0
      %366 = vmatprep.subr.bf16.mxu0 0
      %367 = vmatpush1.bf16.xpose.msra.mxu0 0
      %368 = vmatprep.subr.bf16.mxu0 0
      %369 = vmatpush1.bf16.xpose.msra.mxu0 0
      %370 = vmatprep.subr.bf16.mxu0 0
      %371 = vmatpush1.bf16.xpose.msra.mxu0 0
      %372 = vmatprep.subr.bf16.mxu0 0
      %373 = vmatpush1.bf16.xpose.msra.mxu0 0
      %374 = vmatprep.subr.bf16.mxu0 0
      %375 = vmatpush1.bf16.xpose.msra.mxu0 0
      %376 = vmatprep.subr.bf16.mxu0 0
      %377 = vmatpush1.bf16.xpose.msra.mxu0 0
      %378 = vmatprep.subr.bf16.mxu0 0
      %379 = vmatpush1.bf16.xpose.msra.mxu0 0
      %380 = vmatprep.subr.bf16.mxu0 0
      %381 = vmatpush1.bf16.xpose.msra.mxu0 0
      %382 = vmatprep.subr.bf16.mxu0 0
      %383 = vmatpush1.bf16.xpose.msra.mxu0 0
      %384 = vmatprep.subr.bf16.mxu0 0
      %385 = vmatpush1.bf16.xpose.msra.mxu0 0
      %386 = vmatprep.subr.bf16.mxu0 0
      %387 = vmatpush1.bf16.xpose.msra.mxu0 0
      %388 = vmatprep.mubr.bf16.mxu0 0
      %389 = vmatmul.mubr.bf16.gmra.mrb[0].mxu0 %v351
      %v390 = vpop.f32.mrb[0].mxu0
      %v391 = vadd.f32 0.0, %v390
      %v392 = vpop.f32.mrb[0].mxu0
      %v393 = vpop.f32.mrb[0].mxu0
      %v394 = vpop.f32.mrb[0].mxu0
      %395 = vdwg.mxu0
      %v397 = vsel %vm303, %v292, 0
      %v400 = vsel %vm303, %v296, 0
      %402 = vmatprep.subr.bf16.mxu0 0
      %403 = vmatpush1.bf16.xpose.msra.mxu0 %v400
      %404 = vmatprep.subr.bf16.mxu0 0
      %405 = vmatpush1.bf16.xpose.msra.mxu0 0
      %406 = vmatprep.subr.bf16.mxu0 0
      %407 = vmatpush1.bf16.xpose.msra.mxu0 0
      %408 = vmatprep.subr.bf16.mxu0 0
      %409 = vmatpush1.bf16.xpose.msra.mxu0 0
      %410 = vmatprep.subr.bf16.mxu0 0
      %411 = vmatpush1.bf16.xpose.msra.mxu0 0
      %412 = vmatprep.subr.bf16.mxu0 0
      %413 = vmatpush1.bf16.xpose.msra.mxu0 0
      %414 = vmatprep.subr.bf16.mxu0 0
      %415 = vmatpush1.bf16.xpose.msra.mxu0 0
      %416 = vmatprep.subr.bf16.mxu0 0
      %417 = vmatpush1.bf16.xpose.msra.mxu0 0
      %418 = vmatprep.subr.bf16.mxu0 0
      %419 = vmatpush1.bf16.xpose.msra.mxu0 0
      %420 = vmatprep.subr.bf16.mxu0 0
      %421 = vmatpush1.bf16.xpose.msra.mxu0 0
      %422 = vmatprep.subr.bf16.mxu0 0
      %423 = vmatpush1.bf16.xpose.msra.mxu0 0
      %424 = vmatprep.subr.bf16.mxu0 0
      %425 = vmatpush1.bf16.xpose.msra.mxu0 0
      %426 = vmatprep.subr.bf16.mxu0 0
      %427 = vmatpush1.bf16.xpose.msra.mxu0 0
      %428 = vmatprep.subr.bf16.mxu0 0
      %429 = vmatpush1.bf16.xpose.msra.mxu0 0
      %430 = vmatprep.subr.bf16.mxu0 0
      %431 = vmatpush1.bf16.xpose.msra.mxu0 0
      %432 = vmatprep.subr.bf16.mxu0 0
      %433 = vmatpush1.bf16.xpose.msra.mxu0 0
      %434 = vmatprep.mubr.bf16.mxu0 0
      %435 = vmatmul.mubr.bf16.gmra.mrb[0].mxu0 %v397
      %v436 = vpop.f32.mrb[0].mxu0
      %v437 = vadd.f32 0.0, %v436
      %v438 = vpop.f32.mrb[0].mxu0
      %v439 = vpop.f32.mrb[0].mxu0
      %v440 = vpop.f32.mrb[0].mxu0
      %441 = vdwg.mxu0
      %v443 = vsel %vm303, %v293, 0
      %v446 = vsel %vm303, %v297, 0
      %448 = vmatprep.subr.bf16.mxu0 0
      %449 = vmatpush1.bf16.xpose.msra.mxu0 %v446
      %450 = vmatprep.subr.bf16.mxu0 0
      %451 = vmatpush1.bf16.xpose.msra.mxu0 0
      %452 = vmatprep.subr.bf16.mxu0 0
      %453 = vmatpush1.bf16.xpose.msra.mxu0 0
      %454 = vmatprep.subr.bf16.mxu0 0
      %455 = vmatpush1.bf16.xpose.msra.mxu0 0
      %456 = vmatprep.subr.bf16.mxu0 0
      %457 = vmatpush1.bf16.xpose.msra.mxu0 0
      %458 = vmatprep.subr.bf16.mxu0 0
      %459 = vmatpush1.bf16.xpose.msra.mxu0 0
      %460 = vmatprep.subr.bf16.mxu0 0
      %461 = vmatpush1.bf16.xpose.msra.mxu0 0
      %462 = vmatprep.subr.bf16.mxu0 0
      %463 = vmatpush1.bf16.xpose.msra.mxu0 0
      %464 = vmatprep.subr.bf16.mxu0 0
      %465 = vmatpush1.bf16.xpose.msra.mxu0 0
      %466 = vmatprep.subr.bf16.mxu0 0
      %467 = vmatpush1.bf16.xpose.msra.mxu0 0
      %468 = vmatprep.subr.bf16.mxu0 0
      %469 = vmatpush1.bf16.xpose.msra.mxu0 0
      %470 = vmatprep.subr.bf16.mxu0 0
      %471 = vmatpush1.bf16.xpose.msra.mxu0 0
      %472 = vmatprep.subr.bf16.mxu0 0
      %473 = vmatpush1.bf16.xpose.msra.mxu0 0
      %474 = vmatprep.subr.bf16.mxu0 0
      %475 = vmatpush1.bf16.xpose.msra.mxu0 0
      %476 = vmatprep.subr.bf16.mxu0 0
      %477 = vmatpush1.bf16.xpose.msra.mxu0 0
      %478 = vmatprep.subr.bf16.mxu0 0
      %479 = vmatpush1.bf16.xpose.msra.mxu0 0
      %480 = vmatprep.mubr.bf16.mxu0 0
      %481 = vmatmul.mubr.bf16.gmra.mrb[0].mxu0 %v443
      %v482 = vpop.f32.mrb[0].mxu0
      %v483 = vadd.f32 0.0, %v482
      %v484 = vpop.f32.mrb[0].mxu0
      %v485 = vpop.f32.mrb[0].mxu0
      %v486 = vpop.f32.mrb[0].mxu0
      %487 = vdwg.mxu0
      %v488 = vmul.f32 %v345, 0.35355338
      %v489 = vmul.f32 %v391, 0.35355338
      %v490 = vmul.f32 %v437, 0.35355338
      %v491 = vmul.f32 %v483, 0.35355338
      %v493 = vlaneseq
      %v494 = vshrl.u32 %v493, 7
      %v495 = vsub.s32 0, %v494
      %v496 = vrot.slane %v302, %v495
      %v498 = vadd.f32 %v488, %v496
      %v499 = vadd.f32 %v489, %v496
      %v500 = vadd.f32 %v490, %v496
      %v501 = vadd.f32 %v491, %v496
      %v502 = vsel %vm303, %v498, -inf
      %503 = vmax.xlane.f32.xlu0 %v502
      %v504 = vpop.xlane.xlu0 %503
      %v505 = vsel %vm303, %v499, -inf
      %506 = vmax.xlane.f32.xlu0 %v505
      %v507 = vpop.xlane.xlu0 %506
      %v508 = vsel %vm303, %v500, -inf
      %509 = vmax.xlane.f32.xlu0 %v508
      %v510 = vpop.xlane.xlu0 %509
      %v511 = vsel %vm303, %v501, -inf
      %512 = vmax.xlane.f32.xlu0 %v511
      %v513 = vpop.xlane.xlu0 %512
      %v514 = vsub.f32 %v498, %v504
      %v515 = vsub.f32 %v499, %v507
      %v516 = vsub.f32 %v500, %v510
      %v517 = vsub.f32 %v501, %v513
      %v518 = vmul.f32 %v514, 1.442695
      %v519 = vpow.pop %v518
      %v520 = vmul.f32 %v515, 1.442695
      %v521 = vpow.pop %v520
      %v522 = vmul.f32 %v516, 1.442695
      %v523 = vpow.pop %v522
      %v524 = vmul.f32 %v517, 1.442695
      %v525 = vpow.pop %v524
      %v526 = vsel %vm303, %v519, 0.0
      %527 = vadd.xlane.f32.xlu0 %v526
      %v528 = vpop.xlane.xlu0 %527
      %v529 = vsel %vm303, %v521, 0.0
      %530 = vadd.xlane.f32.xlu0 %v529
      %v531 = vpop.xlane.xlu0 %530
      %v532 = vsel %vm303, %v523, 0.0
      %533 = vadd.xlane.f32.xlu0 %v532
      %v534 = vpop.xlane.xlu0 %533
      %v535 = vsel %vm303, %v525, 0.0
      %536 = vadd.xlane.f32.xlu0 %v535
      %v537 = vpop.xlane.xlu0 %536
      %v538 = vrcp.pop %v528
      %v539 = vrcp.pop %v531
      %v540 = vrcp.pop %v534
      %v541 = vrcp.pop %v537
      %v542 = vmul.f32 %v519, %v538
      %v543 = vmul.f32 %v521, %v539
      %v544 = vmul.f32 %v523, %v540
      %v545 = vmul.f32 %v525, %v541
      %v546 = vpack.c.bf16 %v542, %v542
      %v547 = vpack.c.bf16 %v543, %v543
      %v548 = vpack.c.bf16 %v544, %v544
      %v549 = vpack.c.bf16 %v545, %v545
      %v551 = vsel %vm303, %v546, 0
      %vm553 = vcmask 1043456
      %v555 = vsel %vm553, %v298, 0
      %557 = vmatprep.subr.bf16.mxu0 0
      %558 = vmatpush1.bf16.msra.mxu0 %v555
      %559 = vmatprep.subr.bf16.mxu0 0
      %560 = vmatpush1.bf16.msra.mxu0 0
      %561 = vmatprep.subr.bf16.mxu0 0
      %562 = vmatpush1.bf16.msra.mxu0 0
      %563 = vmatprep.subr.bf16.mxu0 0
      %564 = vmatpush1.bf16.msra.mxu0 0
      %565 = vmatprep.subr.bf16.mxu0 0
      %566 = vmatpush1.bf16.msra.mxu0 0
      %567 = vmatprep.subr.bf16.mxu0 0
      %568 = vmatpush1.bf16.msra.mxu0 0
      %569 = vmatprep.subr.bf16.mxu0 0
      %570 = vmatpush1.bf16.msra.mxu0 0
      %571 = vmatprep.subr.bf16.mxu0 0
      %572 = vmatpush1.bf16.msra.mxu0 0
      %573 = vmatprep.subr.bf16.mxu0 0
      %574 = vmatpush1.bf16.msra.mxu0 0
      %575 = vmatprep.subr.bf16.mxu0 0
      %576 = vmatpush1.bf16.msra.mxu0 0
      %577 = vmatprep.subr.bf16.mxu0 0
      %578 = vmatpush1.bf16.msra.mxu0 0
      %579 = vmatprep.subr.bf16.mxu0 0
      %580 = vmatpush1.bf16.msra.mxu0 0
      %581 = vmatprep.subr.bf16.mxu0 0
      %582 = vmatpush1.bf16.msra.mxu0 0
      %583 = vmatprep.subr.bf16.mxu0 0
      %584 = vmatpush1.bf16.msra.mxu0 0
      %585 = vmatprep.subr.bf16.mxu0 0
      %586 = vmatpush1.bf16.msra.mxu0 0
      %587 = vmatprep.subr.bf16.mxu0 0
      %588 = vmatpush1.bf16.msra.mxu0 0
      %589 = vmatprep.mubr.bf16.mxu0 0
      %590 = vmatmul.mubr.bf16.gmra.mrb[0].mxu0 %v551
      %v591 = vpop.f32.mrb[0].mxu0
      %v592 = vadd.f32 0.0, %v591
      %v593 = vpop.f32.mrb[0].mxu0
      %v594 = vpop.f32.mrb[0].mxu0
      %v595 = vpop.f32.mrb[0].mxu0
      %596 = vdwg.mxu0
      %v598 = vsel %vm303, %v547, 0
      %v601 = vsel %vm553, %v299, 0
      %603 = vmatprep.subr.bf16.mxu0 0
      %604 = vmatpush1.bf16.msra.mxu0 %v601
      %605 = vmatprep.subr.bf16.mxu0 0
      %606 = vmatpush1.bf16.msra.mxu0 0
      %607 = vmatprep.subr.bf16.mxu0 0
      %608 = vmatpush1.bf16.msra.mxu0 0
      %609 = vmatprep.subr.bf16.mxu0 0
      %610 = vmatpush1.bf16.msra.mxu0 0
      %611 = vmatprep.subr.bf16.mxu0 0
      %612 = vmatpush1.bf16.msra.mxu0 0
      %613 = vmatprep.subr.bf16.mxu0 0
      %614 = vmatpush1.bf16.msra.mxu0 0
      %615 = vmatprep.subr.bf16.mxu0 0
      %616 = vmatpush1.bf16.msra.mxu0 0
      %617 = vmatprep.subr.bf16.mxu0 0
      %618 = vmatpush1.bf16.msra.mxu0 0
      %619 = vmatprep.subr.bf16.mxu0 0
      %620 = vmatpush1.bf16.msra.mxu0 0
      %621 = vmatprep.subr.bf16.mxu0 0
      %622 = vmatpush1.bf16.msra.mxu0 0
      %623 = vmatprep.subr.bf16.mxu0 0
      %624 = vmatpush1.bf16.msra.mxu0 0
      %625 = vmatprep.subr.bf16.mxu0 0
      %626 = vmatpush1.bf16.msra.mxu0 0
      %627 = vmatprep.subr.bf16.mxu0 0
      %628 = vmatpush1.bf16.msra.mxu0 0
      %629 = vmatprep.subr.bf16.mxu0 0
      %630 = vmatpush1.bf16.msra.mxu0 0
      %631 = vmatprep.subr.bf16.mxu0 0
      %632 = vmatpush1.bf16.msra.mxu0 0
      %633 = vmatprep.subr.bf16.mxu0 0
      %634 = vmatpush1.bf16.msra.mxu0 0
      %635 = vmatprep.mubr.bf16.mxu0 0
      %636 = vmatmul.mubr.bf16.gmra.mrb[0].mxu0 %v598
      %v637 = vpop.f32.mrb[0].mxu0
      %v638 = vadd.f32 0.0, %v637
      %v639 = vpop.f32.mrb[0].mxu0
      %v640 = vpop.f32.mrb[0].mxu0
      %v641 = vpop.f32.mrb[0].mxu0
      %642 = vdwg.mxu0
      %v644 = vsel %vm303, %v548, 0
      %v647 = vsel %vm553, %v300, 0
      %649 = vmatprep.subr.bf16.mxu0 0
      %650 = vmatpush1.bf16.msra.mxu0 %v647
      %651 = vmatprep.subr.bf16.mxu0 0
      %652 = vmatpush1.bf16.msra.mxu0 0
      %653 = vmatprep.subr.bf16.mxu0 0
      %654 = vmatpush1.bf16.msra.mxu0 0
      %655 = vmatprep.subr.bf16.mxu0 0
      %656 = vmatpush1.bf16.msra.mxu0 0
      %657 = vmatprep.subr.bf16.mxu0 0
      %658 = vmatpush1.bf16.msra.mxu0 0
      %659 = vmatprep.subr.bf16.mxu0 0
      %660 = vmatpush1.bf16.msra.mxu0 0
      %661 = vmatprep.subr.bf16.mxu0 0
      %662 = vmatpush1.bf16.msra.mxu0 0
      %663 = vmatprep.subr.bf16.mxu0 0
      %664 = vmatpush1.bf16.msra.mxu0 0
      %665 = vmatprep.subr.bf16.mxu0 0
      %666 = vmatpush1.bf16.msra.mxu0 0
      %667 = vmatprep.subr.bf16.mxu0 0
      %668 = vmatpush1.bf16.msra.mxu0 0
      %669 = vmatprep.subr.bf16.mxu0 0
      %670 = vmatpush1.bf16.msra.mxu0 0
      %671 = vmatprep.subr.bf16.mxu0 0
      %672 = vmatpush1.bf16.msra.mxu0 0
      %673 = vmatprep.subr.bf16.mxu0 0
      %674 = vmatpush1.bf16.msra.mxu0 0
      %675 = vmatprep.subr.bf16.mxu0 0
      %676 = vmatpush1.bf16.msra.mxu0 0
      %677 = vmatprep.subr.bf16.mxu0 0
      %678 = vmatpush1.bf16.msra.mxu0 0
      %679 = vmatprep.subr.bf16.mxu0 0
      %680 = vmatpush1.bf16.msra.mxu0 0
      %681 = vmatprep.mubr.bf16.mxu0 0
      %682 = vmatmul.mubr.bf16.gmra.mrb[0].mxu0 %v644
      %v683 = vpop.f32.mrb[0].mxu0
      %v684 = vadd.f32 0.0, %v683
      %v685 = vpop.f32.mrb[0].mxu0
      %v686 = vpop.f32.mrb[0].mxu0
      %v687 = vpop.f32.mrb[0].mxu0
      %688 = vdwg.mxu0
      %v690 = vsel %vm303, %v549, 0
      %v693 = vsel %vm553, %v301, 0
      %695 = vmatprep.subr.bf16.mxu0 0
      %696 = vmatpush1.bf16.msra.mxu0 %v693
      %697 = vmatprep.subr.bf16.mxu0 0
      %698 = vmatpush1.bf16.msra.mxu0 0
      %699 = vmatprep.subr.bf16.mxu0 0
      %700 = vmatpush1.bf16.msra.mxu0 0
      %701 = vmatprep.subr.bf16.mxu0 0
      %702 = vmatpush1.bf16.msra.mxu0 0
      %703 = vmatprep.subr.bf16.mxu0 0
      %704 = vmatpush1.bf16.msra.mxu0 0
      %705 = vmatprep.subr.bf16.mxu0 0
      %706 = vmatpush1.bf16.msra.mxu0 0
      %707 = vmatprep.subr.bf16.mxu0 0
      %708 = vmatpush1.bf16.msra.mxu0 0
      %709 = vmatprep.subr.bf16.mxu0 0
      %710 = vmatpush1.bf16.msra.mxu0 0
      %711 = vmatprep.subr.bf16.mxu0 0
      %712 = vmatpush1.bf16.msra.mxu0 0
      %713 = vmatprep.subr.bf16.mxu0 0
      %714 = vmatpush1.bf16.msra.mxu0 0
      %715 = vmatprep.subr.bf16.mxu0 0
      %716 = vmatpush1.bf16.msra.mxu0 0
      %717 = vmatprep.subr.bf16.mxu0 0
      %718 = vmatpush1.bf16.msra.mxu0 0
      %719 = vmatprep.subr.bf16.mxu0 0
      %720 = vmatpush1.bf16.msra.mxu0 0
      %721 = vmatprep.subr.bf16.mxu0 0
      %722 = vmatpush1.bf16.msra.mxu0 0
      %723 = vmatprep.subr.bf16.mxu0 0
      %724 = vmatpush1.bf16.msra.mxu0 0
      %725 = vmatprep.subr.bf16.mxu0 0
      %726 = vmatpush1.bf16.msra.mxu0 0
      %727 = vmatprep.mubr.bf16.mxu0 0
      %728 = vmatmul.mubr.bf16.gmra.mrb[0].mxu0 %v690
      %v729 = vpop.f32.mrb[0].mxu0
      %v730 = vadd.f32 0.0, %v729
      %v731 = vpop.f32.mrb[0].mxu0
      %v732 = vpop.f32.mrb[0].mxu0
      %v733 = vpop.f32.mrb[0].mxu0
      %734 = vdwg.mxu0
      %v735 = vpack.c.bf16 %v592, %v592
      %v736 = vpack.c.bf16 %v638, %v638
      %v737 = vpack.c.bf16 %v684, %v684
      %v738 = vpack.c.bf16 %v730, %v730
      %vm739 = vcmask 60416
      %740 = vst.msk [vmem:[%s288] sm:$0xf] %vm739, %v735
      %741 = vst.msk [vmem:[%s288 + $0x4] sm:$0xf] %vm739, %v736
      %742 = vst.msk [vmem:[%s288 + $0x8] sm:$0xf] %vm739, %v737
      %743 = vst.msk [vmem:[%s288 + $0xc] sm:$0xf] %vm739, %v738
      %p744 = scmp.lt.s32.totalorder %s19, 1
      %s745 = scalar_select %p744, %s19, 1
      %p746 = scmp.lt.s32.totalorder %s20, 0
      %s747 = scalar_select %p746, %s20, 0
      %s748 = smul.addr %s745, 4
      %s749 = sadd.s32 %s747, %s748
      %s750 = smul.addr %s749, 4
      %s751 = scalar_lea.vmem %s4, %s750
      // Predicated region
      $region37: #{bert_pooled_forward.14} parent=35 // pred_check
        %p752 = pneg %p153
      $region38: #{bert_pooled_forward.14} parent=35 // pred_check_branch
        %754 = sbr.rel (%p752) target = $region40
      $region39: #{bert_pooled_forward.14} parent=35 // pred_region
        _
      $region40: #{bert_pooled_forward.14} parent=35 // pred_fallthru
        _
    $region36: #{bert_pooled_forward.14} parent=5 // pred_fallthru
      _
    %p755 = scmp.le.s32.totalorder 2, %s10
    // Predicated region
    $region41: #{bert_pooled_forward.14} parent=5 // pred_check
      %p756 = pneg %p755
    $region42: #{bert_pooled_forward.14} parent=5 // pred_check_branch
      %758 = sbr.rel (%p756) target = $region44
    $region43: #{bert_pooled_forward.14} parent=5 // pred_region
      %s759 = ssub.s32 %s10, 2
      // Predicated region
      $region45: #{bert_pooled_forward.14} parent=43 // pred_check
        %p760 = pneg %p159
      $region46: #{bert_pooled_forward.14} parent=43 // pred_check_branch
        %762 = sbr.rel (%p760) target = $region48
      $region47: #{bert_pooled_forward.14} parent=43 // pred_region
        %p763 = scmp.lt.s32.totalorder %s21, 1
        %s764 = scalar_select %p763, %s21, 1
        %p765 = scmp.lt.s32.totalorder %s22, 0
        %s766 = scalar_select %p765, %s22, 0
        %s767 = smul.addr %s764, 4
        %s768 = sadd.s32 %s766, %s767
        %s769 = smul.addr %s768, 4
        %s770 = scalar_lea.vmem %s4, %s769
      $region48: #{bert_pooled_forward.14} parent=43 // pred_fallthru
        _
    $region44: #{bert_pooled_forward.14} parent=5 // pred_fallthru
      _
  $region6: #{bert_pooled_forward.14} parent=0 // loop_footer
    %s14 = sadd.s32 1, %s10
  $region7: #{bert_pooled_forward.14} parent=0 // loop_footer_branch
    %9 = sbr.rel target = $region3
  $region8: #{bert_pooled_forward.14} parent=0 // loop_exit
    _

// kernel: bert_pooled_forward.16
$region0: #{bert_pooled_forward.16}
  #allocation0 [shape = 'u32[]', space=smem, size = 0x4, offset = 0x4, fixed_abs, tag = 'smem constant byte address 0x4 - core index']
  #allocation1 [shape = 'u32[144,128]{1,0:T(1,128)}', space=vmem, size = 0x12000, scoped, tag = 'internal scratch']
  #allocation2 [shape = 'f32[16,64]{1,0:T(8,128)}', space=vmem, size = 0x2000, scoped, tag = 'scratch operand']
  %s0 = inlined_call_operand.vmem [shape: bf16[16,32], index: 0, kind: input, shape index: {}]
  %s1 = inlined_call_operand.vmem [shape: bf16[32,64], index: 1, kind: input, shape index: {}]
  %s2 = inlined_call_operand.vmem [shape: f32[1,64], index: 2, kind: input, shape index: {}]
  %s3 = inlined_call_operand.vmem [shape: bf16[16,64], index: 3, kind: output, shape index: {}]
  %s4 = sld [smem:[#allocation0]]
  $region30: #{bert_pooled_forward.16} parent=0
    _
  %s6 = ssub.s32 1, %s4
  %s7 = scalar_select 0, %s6, %s4
  // Predicated region
  $region2: #{bert_pooled_forward.16} parent=0 // pred_check
    _
  $region3: #{bert_pooled_forward.16} parent=0 // pred_check_branch
    %9 = sbr.rel (0) target = $region5
  $region4: #{bert_pooled_forward.16} parent=0 // pred_region
    _
  $region5: #{bert_pooled_forward.16} parent=0 // pred_fallthru
    _
  // Predicated region
  $region6: #{bert_pooled_forward.16} parent=0 // pred_check
    _
  $region7: #{bert_pooled_forward.16} parent=0 // pred_check_branch
    %11 = sbr.rel (0) target = $region9
  $region8: #{bert_pooled_forward.16} parent=0 // pred_region
    _
  $region9: #{bert_pooled_forward.16} parent=0 // pred_fallthru
    _
  // Predicated region
  $region10: #{bert_pooled_forward.16} parent=0 // pred_check
    _
  $region11: #{bert_pooled_forward.16} parent=0 // pred_check_branch
    %13 = sbr.rel (0) target = $region13
  $region12: #{bert_pooled_forward.16} parent=0 // pred_region
    _
  $region13: #{bert_pooled_forward.16} parent=0 // pred_fallthru
    _
  %p15 = scmp.eq.s32.totalorder 0, 0
  // Predicated region
  $region14: #{bert_pooled_forward.16} parent=0 // pred_check
    %p16 = pneg %p15
  $region15: #{bert_pooled_forward.16} parent=0 // pred_check_branch
    %18 = sbr.rel (%p16) target = $region17
  $region16: #{bert_pooled_forward.16} parent=0 // pred_region
    %vm19 = vcmask 523264
    %20 = vst.msk [vmem:[#allocation2] sm:$0xff] %vm19, 0.0
    %21 = vst.msk [vmem:[#allocation2 + $0x8] sm:$0xff] %vm19, 0.0
  $region17: #{bert_pooled_forward.16} parent=0 // pred_fallthru
    _
  %v22 = vld [vmem:[#allocation2] sm:$0xff]
  %v23 = vld [vmem:[#allocation2 + $0x8] sm:$0xff]
  %v24 = vld [vmem:[%s0] sm:$0xf]
  %v25 = vld [vmem:[%s0 + $0x4] sm:$0xf]
  %v26 = vld [vmem:[%s1] sm:$0xf]
  %v27 = vld [vmem:[%s1 + $0x4] sm:$0xf]
  %v28 = vld [vmem:[%s1 + $0x8] sm:$0xf]
  %v29 = vld [vmem:[%s1 + $0xc] sm:$0xf]
  %v32 = vunpack.c.l.b16 %v24
  %v33 = vunpack.c.l.b16 %v25
  %v34 = vpack.c.b16 %v33, %v32
  %v39 = vunpack.c.l.b16 %v26
  %v40 = vunpack.c.l.b16 %v27
  %v41 = vunpack.c.l.b16 %v28
  %v42 = vunpack.c.l.b16 %v29
  %v43 = vpack.c.b16 %v40, %v39
  %v44 = vpack.c.b16 %v42, %v41
  %vm47 = vcmask 261120
  %v49 = vsel %vm47, %v34, 0
  %51 = vmatprep.subr.bf16.mxu0 0
  %52 = vmatpush1.bf16.msra.mxu0 %v43
  %53 = vmatprep.subr.bf16.mxu0 0
  %54 = vmatpush1.bf16.msra.mxu0 %v44
  %55 = vmatprep.subr.bf16.mxu0 0
  %56 = vmatpush1.bf16.msra.mxu0 0
  %57 = vmatprep.subr.bf16.mxu0 0
  %58 = vmatpush1.bf16.msra.mxu0 0
  %59 = vmatprep.subr.bf16.mxu0 0
  %60 = vmatpush1.bf16.msra.mxu0 0
  %61 = vmatprep.subr.bf16.mxu0 0
  %62 = vmatpush1.bf16.msra.mxu0 0
  %63 = vmatprep.subr.bf16.mxu0 0
  %64 = vmatpush1.bf16.msra.mxu0 0
  %65 = vmatprep.subr.bf16.mxu0 0
  %66 = vmatpush1.bf16.msra.mxu0 0
  %67 = vmatprep.subr.bf16.mxu0 0
  %68 = vmatpush1.bf16.msra.mxu0 0
  %69 = vmatprep.subr.bf16.mxu0 0
  %70 = vmatpush1.bf16.msra.mxu0 0
  %71 = vmatprep.subr.bf16.mxu0 0
  %72 = vmatpush1.bf16.msra.mxu0 0
  %73 = vmatprep.subr.bf16.mxu0 0
  %74 = vmatpush1.bf16.msra.mxu0 0
  %75 = vmatprep.subr.bf16.mxu0 0
  %76 = vmatpush1.bf16.msra.mxu0 0
  %77 = vmatprep.subr.bf16.mxu0 0
  %78 = vmatpush1.bf16.msra.mxu0 0
  %79 = vmatprep.subr.bf16.mxu0 0
  %80 = vmatpush1.bf16.msra.mxu0 0
  %81 = vmatprep.subr.bf16.mxu0 0
  %82 = vmatpush1.bf16.msra.mxu0 0
  %83 = vmatprep.mubr.bf16.mxu0 0
  %84 = vmatmul.mubr.bf16.gmra.mrb[0].mxu0 %v49
  %v85 = vpop.f32.mrb[0].mxu0
  %v86 = vadd.f32 0.0, %v85
  %v87 = vpop.f32.mrb[0].mxu0
  %v88 = vpop.f32.mrb[0].mxu0
  %v89 = vadd.f32 0.0, %v88
  %v90 = vpop.f32.mrb[0].mxu0
  %91 = vdwg.mxu0
  %v92 = vadd.f32 %v22, %v86
  %v93 = vadd.f32 %v23, %v89
  %vm94 = vcmask 523264
  %95 = vst.msk [vmem:[#allocation2] sm:$0xff] %vm94, %v92
  %96 = vst.msk [vmem:[#allocation2 + $0x8] sm:$0xff] %vm94, %v93
  // Predicated region
  $region18: #{bert_pooled_forward.16} parent=0 // pred_check
    %p97 = pneg %p15
  $region19: #{bert_pooled_forward.16} parent=0 // pred_check_branch
    %99 = sbr.rel (%p97) target = $region21
  $region20: #{bert_pooled_forward.16} parent=0 // pred_region
    %v100 = vld [vmem:[#allocation2] sm:$0xff]
    %v101 = vld [vmem:[#allocation2 + $0x8] sm:$0xff]
    %v102 = vld [vmem:[%s2] sm:$0x1]
    %v104 = vlaneseq
    %v105 = vshrl.u32 %v104, 7
    %v106 = vsub.s32 0, %v105
    %v107 = vrot.slane %v102, %v106
    %v109 = vadd.f32 %v100, %v107
    %v110 = vadd.f32 %v101, %v107
    %v111 = vmul.f32 %v109, 0.5
    %v112 = vmul.f32 %v110, 0.5
    %v113 = vmul.f32 %v109, 0.70710677
    %v114 = vmul.f32 %v110, 0.70710677
    %v115 = verf.f32.pop %v113
    %v116 = verf.f32.pop %v114
    %v117 = vadd.f32 %v115, 1.0
    %v118 = vadd.f32 %v116, 1.0
    %v119 = vmul.f32 %v111, %v117
    %v120 = vmul.f32 %v112, %v118
    %v121 = vpack.c.bf16 %v120, %v119
    %v123 = vunpack.c.l.b16 %v121
    %v124 = vunpack.c.h.b16 %v121
    %v125 = vpack.c.b16 %v123, %v123
    %v126 = vpack.c.b16 %v124, %v124
    %vm129 = vcmask 519168
    %130 = vst.msk [vmem:[%s3] sm:$0xf] %vm129, %v125
    %131 = vst.msk [vmem:[%s3 + $0x4] sm:$0xf] %vm129, %v126
  $region21: #{bert_pooled_forward.16} parent=0 // pred_fallthru
    _
  // Predicated region
  $region22: #{bert_pooled_forward.16} parent=0 // pred_check
    _
  $region23: #{bert_pooled_forward.16} parent=0 // pred_check_branch
    %133 = sbr.rel (0) target = $region25
  $region24: #{bert_pooled_forward.16} parent=0 // pred_region
    _
  $region25: #{bert_pooled_forward.16} parent=0 // pred_fallthru
    _
  // Predicated region
  $region26: #{bert_pooled_forward.16} parent=0 // pred_check
    _
  $region27: #{bert_pooled_forward.16} parent=0 // pred_check_branch
    %135 = sbr.rel (0) target = $region29
  $region28: #{bert_pooled_forward.16} parent=0 // pred_region
    _
  $region29: #{bert_pooled_forward.16} parent=0 // pred_fallthru
    _

// kernel: bert_pooled_forward.15
$region0: #{bert_pooled_forward.15}
  #allocation0 [shape = 'u32[]', space=smem, size = 0x4, offset = 0x4, fixed_abs, tag = 'smem constant byte address 0x4 - core index']
  #allocation1 [shape = 'u32[144,128]{1,0:T(1,128)}', space=vmem, size = 0x12000, scoped, tag = 'internal scratch']
  #allocation2 [shape = 'f32[16,32]{1,0:T(8,128)}', space=vmem, size = 0x2000, scoped, tag = 'scratch operand']
  %s0 = inlined_call_operand.vmem [shape: bf16[16,32], index: 0, kind: input, shape index: {}]
  %s1 = inlined_call_operand.vmem [shape: bf16[32,32], index: 1, kind: input, shape index: {}]
  %s2 = inlined_call_operand.vmem [shape: f32[1,32], index: 2, kind: input, shape index: {}]
  %s3 = inlined_call_operand.vmem [shape: bf16[16,32], index: 3, kind: input, shape index: {}]
  %s4 = inlined_call_operand.vmem [shape: f32[1,32], index: 4, kind: input, shape index: {}]
  %s5 = inlined_call_operand.vmem [shape: f32[1,32], index: 5, kind: input, shape index: {}]
  %s6 = inlined_call_operand.vmem [shape: bf16[16,32], index: 6, kind: output, shape index: {}]
  %s7 = sld [smem:[#allocation0]]
  $region42: #{bert_pooled_forward.15} parent=0
    _
  %s9 = ssub.s32 1, %s7
  %s10 = scalar_select 0, %s9, %s7
  // Predicated region
  $region2: #{bert_pooled_forward.15} parent=0 // pred_check
    _
  $region3: #{bert_pooled_forward.15} parent=0 // pred_check_branch
    %12 = sbr.rel (0) target = $region5
  $region4: #{bert_pooled_forward.15} parent=0 // pred_region
    _
  $region5: #{bert_pooled_forward.15} parent=0 // pred_fallthru
    _
  // Predicated region
  $region6: #{bert_pooled_forward.15} parent=0 // pred_check
    _
  $region7: #{bert_pooled_forward.15} parent=0 // pred_check_branch
    %14 = sbr.rel (0) target = $region9
  $region8: #{bert_pooled_forward.15} parent=0 // pred_region
    _
  $region9: #{bert_pooled_forward.15} parent=0 // pred_fallthru
    _
  // Predicated region
  $region10: #{bert_pooled_forward.15} parent=0 // pred_check
    _
  $region11: #{bert_pooled_forward.15} parent=0 // pred_check_branch
    %16 = sbr.rel (0) target = $region13
  $region12: #{bert_pooled_forward.15} parent=0 // pred_region
    _
  $region13: #{bert_pooled_forward.15} parent=0 // pred_fallthru
    _
  // Predicated region
  $region14: #{bert_pooled_forward.15} parent=0 // pred_check
    _
  $region15: #{bert_pooled_forward.15} parent=0 // pred_check_branch
    %18 = sbr.rel (0) target = $region17
  $region16: #{bert_pooled_forward.15} parent=0 // pred_region
    _
  $region17: #{bert_pooled_forward.15} parent=0 // pred_fallthru
    _
  // Predicated region
  $region18: #{bert_pooled_forward.15} parent=0 // pred_check
    _
  $region19: #{bert_pooled_forward.15} parent=0 // pred_check_branch
    %20 = sbr.rel (0) target = $region21
  $region20: #{bert_pooled_forward.15} parent=0 // pred_region
    _
  $region21: #{bert_pooled_forward.15} parent=0 // pred_fallthru
    _
  // Predicated region
  $region22: #{bert_pooled_forward.15} parent=0 // pred_check
    _
  $region23: #{bert_pooled_forward.15} parent=0 // pred_check_branch
    %22 = sbr.rel (0) target = $region25
  $region24: #{bert_pooled_forward.15} parent=0 // pred_region
    _
  $region25: #{bert_pooled_forward.15} parent=0 // pred_fallthru
    _
  %p24 = scmp.eq.s32.totalorder 0, 0
  // Predicated region
  $region26: #{bert_pooled_forward.15} parent=0 // pred_check
    %p25 = pneg %p24
  $region27: #{bert_pooled_forward.15} parent=0 // pred_check_branch
    %27 = sbr.rel (%p25) target = $region29
  $region28: #{bert_pooled_forward.15} parent=0 // pred_region
    %vm28 = vcmask 261120
    %29 = vst.msk [vmem:[#allocation2] sm:$0xff] %vm28, 0.0
    %30 = vst.msk [vmem:[#allocation2 + $0x8] sm:$0xff] %vm28, 0.0
  $region29: #{bert_pooled_forward.15} parent=0 // pred_fallthru
    _
  %v31 = vld [vmem:[#allocation2] sm:$0xff]
  %v32 = vld [vmem:[#allocation2 + $0x8] sm:$0xff]
  %v33 = vld [vmem:[%s0] sm:$0xf]
  %v34 = vld [vmem:[%s0 + $0x4] sm:$0xf]
  %v35 = vld [vmem:[%s1] sm:$0xf]
  %v36 = vld [vmem:[%s1 + $0x4] sm:$0xf]
  %v37 = vld [vmem:[%s1 + $0x8] sm:$0xf]
  %v38 = vld [vmem:[%s1 + $0xc] sm:$0xf]
  %v41 = vunpack.c.l.b16 %v33
  %v42 = vunpack.c.l.b16 %v34
  %v43 = vpack.c.b16 %v42, %v41
  %v48 = vunpack.c.l.b16 %v35
  %v49 = vunpack.c.l.b16 %v36
  %v50 = vunpack.c.l.b16 %v37
  %v51 = vunpack.c.l.b16 %v38
  %v52 = vpack.c.b16 %v49, %v48
  %v53 = vpack.c.b16 %v51, %v50
  %vm56 = vcmask 261120
  %v58 = vsel %vm56, %v43, 0
  %60 = vmatprep.subr.bf16.mxu0 0
  %61 = vmatpush1.bf16.msra.mxu0 %v52
  %62 = vmatprep.subr.bf16.mxu0 0
  %63 = vmatpush1.bf16.msra.mxu0 %v53
  %64 = vmatprep.subr.bf16.mxu0 0
  %65 = vmatpush1.bf16.msra.mxu0 0
  %66 = vmatprep.subr.bf16.mxu0 0
  %67 = vmatpush1.bf16.msra.mxu0 0
  %68 = vmatprep.subr.bf16.mxu0 0
  %69 = vmatpush1.bf16.msra.mxu0 0
  %70 = vmatprep.subr.bf16.mxu0 0
  %71 = vmatpush1.bf16.msra.mxu0 0
  %72 = vmatprep.subr.bf16.mxu0 0
  %73 = vmatpush1.bf16.msra.mxu0 0
  %74 = vmatprep.subr.bf16.mxu0 0
  %75 = vmatpush1.bf16.msra.mxu0 0
  %76 = vmatprep.subr.bf16.mxu0 0
  %77 = vmatpush1.bf16.msra.mxu0 0
  %78 = vmatprep.subr.bf16.mxu0 0
  %79 = vmatpush1.bf16.msra.mxu0 0
  %80 = vmatprep.subr.bf16.mxu0 0
  %81 = vmatpush1.bf16.msra.mxu0 0
  %82 = vmatprep.subr.bf16.mxu0 0
  %83 = vmatpush1.bf16.msra.mxu0 0
  %84 = vmatprep.subr.bf16.mxu0 0
  %85 = vmatpush1.bf16.msra.mxu0 0
  %86 = vmatprep.subr.bf16.mxu0 0
  %87 = vmatpush1.bf16.msra.mxu0 0
  %88 = vmatprep.subr.bf16.mxu0 0
  %89 = vmatpush1.bf16.msra.mxu0 0
  %90 = vmatprep.subr.bf16.mxu0 0
  %91 = vmatpush1.bf16.msra.mxu0 0
  %92 = vmatprep.mubr.bf16.mxu0 0
  %93 = vmatmul.mubr.bf16.gmra.mrb[0].mxu0 %v58
  %v94 = vpop.f32.mrb[0].mxu0
  %v95 = vadd.f32 0.0, %v94
  %v96 = vpop.f32.mrb[0].mxu0
  %v97 = vpop.f32.mrb[0].mxu0
  %v98 = vadd.f32 0.0, %v97
  %v99 = vpop.f32.mrb[0].mxu0
  %100 = vdwg.mxu0
  %v101 = vadd.f32 %v31, %v95
  %v102 = vadd.f32 %v32, %v98
  %103 = vst.msk [vmem:[#allocation2] sm:$0xff] %vm56, %v101
  %104 = vst.msk [vmem:[#allocation2 + $0x8] sm:$0xff] %vm56, %v102
  // Predicated region
  $region30: #{bert_pooled_forward.15} parent=0 // pred_check
    %p105 = pneg %p24
  $region31: #{bert_pooled_forward.15} parent=0 // pred_check_branch
    %107 = sbr.rel (%p105) target = $region33
  $region32: #{bert_pooled_forward.15} parent=0 // pred_region
    %v108 = vld [vmem:[#allocation2] sm:$0xff]
    %v109 = vld [vmem:[#allocation2 + $0x8] sm:$0xff]
    %v110 = vld [vmem:[%s2] sm:$0x1]
    %v112 = vlaneseq
    %v113 = vshrl.u32 %v112, 7
    %v114 = vsub.s32 0, %v113
    %v115 = vrot.slane %v110, %v114
    %v117 = vadd.f32 %v108, %v115
    %v118 = vadd.f32 %v109, %v115
    %v119 = vld [vmem:[%s3] sm:$0xf]
    %v120 = vld [vmem:[%s3 + $0x4] sm:$0xf]
    %v121 = vunpack.c.l.bf16 %v119
    %v122 = vunpack.c.l.bf16 %v120
    %v123 = vadd.f32 %v117, %v121
    %v124 = vadd.f32 %v118, %v122
    %v125 = vsel %vm56, %v123, 0.0
    %126 = vadd.xlane.f32.xlu0 %v125
    %v127 = vpop.xlane.xlu0 %126
    %v128 = vsel %vm56, %v124, 0.0
    %129 = vadd.xlane.f32.xlu0 %v128
    %v130 = vpop.xlane.xlu0 %129
    %v131 = vrcp.pop 32.0
    %v132 = vmul.f32 %v127, %v131
    %v133 = vmul.f32 %v130, %v131
    %v134 = vsub.f32 %v123, %v132
    %v135 = vsub.f32 %v124, %v133
    %v136 = vmul.f32 %v134, %v134
    %v137 = vmul.f32 %v135, %v135
    %v138 = vsel %vm56, %v136, 0.0
    %139 = vadd.xlane.f32.xlu0 %v138
    %v140 = vpop.xlane.xlu0 %139
    %v141 = vsel %vm56, %v137, 0.0
    %142 = vadd.xlane.f32.xlu0 %v141
    %v143 = vpop.xlane.xlu0 %142
    %v144 = vmul.f32 %v140, %v131
    %v145 = vmul.f32 %v143, %v131
    %v146 = vadd.f32 %v144, 1e-12
    %v147 = vadd.f32 %v145, 1e-12
    %v148 = vrsqrt.pop %v146
    %v149 = vrsqrt.pop %v147
    %v150 = vmul.f32 %v134, %v148
    %v151 = vmul.f32 %v135, %v149
    %v152 = vld [vmem:[%s4] sm:$0x1]
    %v154 = vlaneseq
    %v155 = vshrl.u32 %v154, 7
    %v156 = vsub.s32 0, %v155
    %v157 = vrot.slane %v152, %v156
    %v159 = vmul.f32 %v150, %v157
    %v160 = vmul.f32 %v151, %v157
    %v161 = vld [vmem:[%s5] sm:$0x1]
    %v163 = vlaneseq
    %v164 = vshrl.u32 %v163, 7
    %v165 = vsub.s32 0, %v164
    %v166 = vrot.slane %v161, %v165
    %v168 = vadd.f32 %v159, %v166
    %v169 = vadd.f32 %v160, %v166
    %v170 = vpack.c.bf16 %v169, %v168
    %v172 = vunpack.c.l.b16 %v170
    %v173 = vunpack.c.h.b16 %v170
    %v174 = vpack.c.b16 %v172, %v172
    %v175 = vpack.c.b16 %v173, %v173
    %vm178 = vcmask 257024
    %179 = vst.msk [vmem:[%s6] sm:$0xf] %vm178, %v174
    %180 = vst.msk [vmem:[%s6 + $0x4] sm:$0xf] %vm178, %v175
  $region33: #{bert_pooled_forward.15} parent=0 // pred_fallthru
    _
  // Predicated region
  $region34: #{bert_pooled_forward.15} parent=0 // pred_check
    _
  $region35: #{bert_pooled_forward.15} parent=0 // pred_check_branch
    %182 = sbr.rel (0) target = $region37
  $region36: #{bert_pooled_forward.15} parent=0 // pred_region
    _
  $region37: #{bert_pooled_forward.15} parent=0 // pred_fallthru
    _
  // Predicated region
  $region38: #{bert_pooled_forward.15} parent=0 // pred_check
    _
  $region39: #{bert_pooled_forward.15} parent=0 // pred_check_branch
    %184 = sbr.rel (0) target = $region41
  $region40: #{bert_pooled_forward.15} parent=0 // pred_region
    _
  $region41: #{bert_pooled_forward.15} parent=0 // pred_fallthru
    _

// kernel: bert_pooled_forward.23
$region0: #{bert_pooled_forward.23}
  #allocation0 [shape = 'u32[]', space=smem, size = 0x4, offset = 0x4, fixed_abs, tag = 'smem constant byte address 0x4 - core index']
  #allocation1 [shape = 'u32[144,128]{1,0:T(1,128)}', space=vmem, size = 0x12000, scoped, tag = 'internal scratch']
  #allocation2 [shape = 'f32[2,32]{1,0:T(2,128)}', space=vmem, size = 0x400, scoped, tag = 'scratch operand']
  %s0 = inlined_call_operand.vmem [shape: bf16[2,32], index: 0, kind: input, shape index: {}]
  %s1 = inlined_call_operand.vmem [shape: bf16[32,32], index: 1, kind: input, shape index: {}]
  %s2 = inlined_call_operand.vmem [shape: f32[1,32], index: 2, kind: input, shape index: {}]
  %s3 = inlined_call_operand.hbm [shape: bf16[2,32], index: 3, kind: output, shape index: {}]
  %s4 = sld [smem:[#allocation0]]
  $region30: #{bert_pooled_forward.23} parent=0
    _
  %s6 = ssub.s32 1, %s4
  %s7 = scalar_select 0, %s6, %s4
  $region1: #{bert_pooled_forward.23} parent=0
    #allocation3 [shape = 'u8[512]{0}', space=vmem, size = 0x400, scoped, tag = 'output window, operand 0, single buffered']
    #allocation4 [shape = 's32[1]{0}', space=sflag, size = 0x4, scoped, tag = 'scoped memory for bert_pooled_forward.23']
    %8 = vsyncpa [#allocation4], 0
    // Predicated region
    $region2: #{bert_pooled_forward.23} parent=1 // pred_check
      _
    $region3: #{bert_pooled_forward.23} parent=1 // pred_check_branch
      %10 = sbr.rel (0) target = $region5
    $region4: #{bert_pooled_forward.23} parent=1 // pred_region
      _
    $region5: #{bert_pooled_forward.23} parent=1 // pred_fallthru
      _
    // Predicated region
    $region6: #{bert_pooled_forward.23} parent=1 // pred_check
      _
    $region7: #{bert_pooled_forward.23} parent=1 // pred_check_branch
      %12 = sbr.rel (0) target = $region9
    $region8: #{bert_pooled_forward.23} parent=1 // pred_region
      _
    $region9: #{bert_pooled_forward.23} parent=1 // pred_fallthru
      _
    // Predicated region
    $region10: #{bert_pooled_forward.23} parent=1 // pred_check
      _
    $region11: #{bert_pooled_forward.23} parent=1 // pred_check_branch
      %14 = sbr.rel (0) target = $region13
    $region12: #{bert_pooled_forward.23} parent=1 // pred_region
      _
    $region13: #{bert_pooled_forward.23} parent=1 // pred_fallthru
      _
    %p16 = scmp.eq.s32.totalorder 0, 0
    // Predicated region
    $region14: #{bert_pooled_forward.23} parent=1 // pred_check
      %p17 = pneg %p16
    $region15: #{bert_pooled_forward.23} parent=1 // pred_check_branch
      %19 = sbr.rel (%p17) target = $region17
    $region16: #{bert_pooled_forward.23} parent=1 // pred_region
      %vm20 = vcmask 254976
      %21 = vst.msk [vmem:[#allocation2] sm:$0x3] %vm20, 0.0
    $region17: #{bert_pooled_forward.23} parent=1 // pred_fallthru
      _
    %v22 = vld [vmem:[#allocation2] sm:$0x3]
    %v23 = vld [vmem:[%s0] sm:$0x1]
    %v24 = vld [vmem:[%s1] sm:$0xf]
    %v25 = vld [vmem:[%s1 + $0x4] sm:$0xf]
    %v26 = vld [vmem:[%s1 + $0x8] sm:$0xf]
    %v27 = vld [vmem:[%s1 + $0xc] sm:$0xf]
    %v32 = vunpack.c.l.b16 %v24
    %v33 = vunpack.c.l.b16 %v25
    %v34 = vunpack.c.l.b16 %v26
    %v35 = vunpack.c.l.b16 %v27
    %v36 = vpack.c.b16 %v33, %v32
    %v37 = vpack.c.b16 %v35, %v34
    %vm40 = vcmask 261120
    %v42 = vsel %vm40, %v23, 0
    %44 = vmatprep.subr.bf16.mxu0 0
    %45 = vmatpush1.bf16.msra.mxu0 %v36
    %46 = vmatprep.subr.bf16.mxu0 0
    %47 = vmatpush1.bf16.msra.mxu0 %v37
    %48 = vmatprep.subr.bf16.mxu0 0
    %49 = vmatpush1.bf16.msra.mxu0 0
    %50 = vmatprep.subr.bf16.mxu0 0
    %51 = vmatpush1.bf16.msra.mxu0 0
    %52 = vmatprep.subr.bf16.mxu0 0
    %53 = vmatpush1.bf16.msra.mxu0 0
    %54 = vmatprep.subr.bf16.mxu0 0
    %55 = vmatpush1.bf16.msra.mxu0 0
    %56 = vmatprep.subr.bf16.mxu0 0
    %57 = vmatpush1.bf16.msra.mxu0 0
    %58 = vmatprep.subr.bf16.mxu0 0
    %59 = vmatpush1.bf16.msra.mxu0 0
    %60 = vmatprep.subr.bf16.mxu0 0
    %61 = vmatpush1.bf16.msra.mxu0 0
    %62 = vmatprep.subr.bf16.mxu0 0
    %63 = vmatpush1.bf16.msra.mxu0 0
    %64 = vmatprep.subr.bf16.mxu0 0
    %65 = vmatpush1.bf16.msra.mxu0 0
    %66 = vmatprep.subr.bf16.mxu0 0
    %67 = vmatpush1.bf16.msra.mxu0 0
    %68 = vmatprep.subr.bf16.mxu0 0
    %69 = vmatpush1.bf16.msra.mxu0 0
    %70 = vmatprep.subr.bf16.mxu0 0
    %71 = vmatpush1.bf16.msra.mxu0 0
    %72 = vmatprep.subr.bf16.mxu0 0
    %73 = vmatpush1.bf16.msra.mxu0 0
    %74 = vmatprep.subr.bf16.mxu0 0
    %75 = vmatpush1.bf16.msra.mxu0 0
    %76 = vmatprep.mubr.bf16.mxu0 0
    %77 = vmatmul.mubr.bf16.gmra.mrb[0].mxu0 %v42
    %v78 = vpop.f32.mrb[0].mxu0
    %v79 = vadd.f32 0.0, %v78
    %v80 = vpop.f32.mrb[0].mxu0
    %v81 = vpop.f32.mrb[0].mxu0
    %v82 = vpop.f32.mrb[0].mxu0
    %83 = vdwg.mxu0
    %v84 = vadd.f32 %v22, %v79
    %vm85 = vcmask 254976
    %86 = vst.msk [vmem:[#allocation2] sm:$0x3] %vm85, %v84
    // Predicated region
    $region18: #{bert_pooled_forward.23} parent=1 // pred_check
      %p87 = pneg %p16
    $region19: #{bert_pooled_forward.23} parent=1 // pred_check_branch
      %89 = sbr.rel (%p87) target = $region21
    $region20: #{bert_pooled_forward.23} parent=1 // pred_region
      %v90 = vld [vmem:[#allocation2] sm:$0x3]
      %v91 = vld [vmem:[%s2] sm:$0x1]
      %v93 = vlaneseq
      %v94 = vshrl.u32 %v93, 7
      %v95 = vsub.s32 0, %v94
      %v96 = vrot.slane %v91, %v95
      %v98 = vadd.f32 %v90, %v96
      %v99 = vtanh.pop %v98
      %v100 = vpack.c.bf16 %v99, %v99
      %vm101 = vcmask 253952
      %102 = vst.msk [vmem:[#allocation3] sm:$0x1] %vm101, %v100
    $region21: #{bert_pooled_forward.23} parent=1 // pred_fallthru
      _
    // Predicated region
    $region22: #{bert_pooled_forward.23} parent=1 // pred_check
      _
    $region23: #{bert_pooled_forward.23} parent=1 // pred_check_branch
      %104 = sbr.rel (0) target = $region25
    $region24: #{bert_pooled_forward.23} parent=1 // pred_region
      %s106 = ssub.s32 16, 16
      %107 = vsyncadd [#allocation4], %s106
      %s109 = sshll.u32 [#allocation3], 4
      %s110 = int_to_ptr.vmem [resolvable:$true] %s109
      %112 = dma.vmem_to_hbm [thread:$0]  %s110, 16, %s3, [#allocation4]
    $region25: #{bert_pooled_forward.23} parent=1 // pred_fallthru
      _
    // Predicated region
    $region26: #{bert_pooled_forward.23} parent=1 // pred_check
      _
    $region27: #{bert_pooled_forward.23} parent=1 // pred_check_branch
      %114 = sbr.rel (0) target = $region29
    $region28: #{bert_pooled_forward.23} parent=1 // pred_region
      %115 = dma.done [#allocation4], 16
    $region29: #{bert_pooled_forward.23} parent=1 // pred_fallthru
      _
    %116 = vsyncpa [#allocation4], 1

// kernel: bert_pooled_forward.17
$region0: #{bert_pooled_forward.17}
  #allocation0 [shape = 'u32[]', space=smem, size = 0x4, offset = 0x4, fixed_abs, tag = 'smem constant byte address 0x4 - core index']
  #allocation1 [shape = 'u32[144,128]{1,0:T(1,128)}', space=vmem, size = 0x12000, scoped, tag = 'internal scratch']
  #allocation2 [shape = 'f32[16,32]{1,0:T(8,128)}', space=vmem, size = 0x2000, scoped, tag = 'scratch operand']
  %s0 = inlined_call_operand.vmem [shape: bf16[16,64], index: 0, kind: input, shape index: {}]
  %s1 = inlined_call_operand.vmem [shape: bf16[64,32], index: 1, kind: input, shape index: {}]
  %s2 = inlined_call_operand.vmem [shape: f32[1,32], index: 2, kind: input, shape index: {}]
  %s3 = inlined_call_operand.vmem [shape: bf16[16,32], index: 3, kind: input, shape index: {}]
  %s4 = inlined_call_operand.vmem [shape: f32[1,32], index: 4, kind: input, shape index: {}]
  %s5 = inlined_call_operand.vmem [shape: f32[1,32], index: 5, kind: input, shape index: {}]
  %s6 = inlined_call_operand.vmem [shape: bf16[16,32], index: 6, kind: output, shape index: {}]
  %s7 = sld [smem:[#allocation0]]
  $region42: #{bert_pooled_forward.17} parent=0
    _
  %s9 = ssub.s32 1, %s7
  %s10 = scalar_select 0, %s9, %s7
  // Predicated region
  $region2: #{bert_pooled_forward.17} parent=0 // pred_check
    _
  $region3: #{bert_pooled_forward.17} parent=0 // pred_check_branch
    %12 = sbr.rel (0) target = $region5
  $region4: #{bert_pooled_forward.17} parent=0 // pred_region
    _
  $region5: #{bert_pooled_forward.17} parent=0 // pred_fallthru
    _
  // Predicated region
  $region6: #{bert_pooled_forward.17} parent=0 // pred_check
    _
  $region7: #{bert_pooled_forward.17} parent=0 // pred_check_branch
    %14 = sbr.rel (0) target = $region9
  $region8: #{bert_pooled_forward.17} parent=0 // pred_region
    _
  $region9: #{bert_pooled_forward.17} parent=0 // pred_fallthru
    _
  // Predicated region
  $region10: #{bert_pooled_forward.17} parent=0 // pred_check
    _
  $region11: #{bert_pooled_forward.17} parent=0 // pred_check_branch
    %16 = sbr.rel (0) target = $region13
  $region12: #{bert_pooled_forward.17} parent=0 // pred_region
    _
  $region13: #{bert_pooled_forward.17} parent=0 // pred_fallthru
    _
  // Predicated region
  $region14: #{bert_pooled_forward.17} parent=0 // pred_check
    _
  $region15: #{bert_pooled_forward.17} parent=0 // pred_check_branch
    %18 = sbr.rel (0) target = $region17
  $region16: #{bert_pooled_forward.17} parent=0 // pred_region
    _
  $region17: #{bert_pooled_forward.17} parent=0 // pred_fallthru
    _
  // Predicated region
  $region18: #{bert_pooled_forward.17} parent=0 // pred_check
    _
  $region19: #{bert_pooled_forward.17} parent=0 // pred_check_branch
    %20 = sbr.rel (0) target = $region21
  $region20: #{bert_pooled_forward.17} parent=0 // pred_region
    _
  $region21: #{bert_pooled_forward.17} parent=0 // pred_fallthru
    _
  // Predicated region
  $region22: #{bert_pooled_forward.17} parent=0 // pred_check
    _
  $region23: #{bert_pooled_forward.17} parent=0 // pred_check_branch
    %22 = sbr.rel (0) target = $region25
  $region24: #{bert_pooled_forward.17} parent=0 // pred_region
    _
  $region25: #{bert_pooled_forward.17} parent=0 // pred_fallthru
    _
  %p24 = scmp.eq.s32.totalorder 0, 0
  // Predicated region
  $region26: #{bert_pooled_forward.17} parent=0 // pred_check
    %p25 = pneg %p24
  $region27: #{bert_pooled_forward.17} parent=0 // pred_check_branch
    %27 = sbr.rel (%p25) target = $region29
  $region28: #{bert_pooled_forward.17} parent=0 // pred_region
    %vm28 = vcmask 261120
    %29 = vst.msk [vmem:[#allocation2] sm:$0xff] %vm28, 0.0
    %30 = vst.msk [vmem:[#allocation2 + $0x8] sm:$0xff] %vm28, 0.0
  $region29: #{bert_pooled_forward.17} parent=0 // pred_fallthru
    _
  %v31 = vld [vmem:[#allocation2] sm:$0xff]
  %v32 = vld [vmem:[#allocation2 + $0x8] sm:$0xff]
  %v33 = vld [vmem:[%s0] sm:$0xf]
  %v34 = vld [vmem:[%s0 + $0x4] sm:$0xf]
  %v35 = vld [vmem:[%s1] sm:$0xf]
  %v36 = vld [vmem:[%s1 + $0x4] sm:$0xf]
  %v37 = vld [vmem:[%s1 + $0x8] sm:$0xf]
  %v38 = vld [vmem:[%s1 + $0xc] sm:$0xf]
  %v39 = vld [vmem:[%s1 + $0x10] sm:$0xf]
  %v40 = vld [vmem:[%s1 + $0x14] sm:$0xf]
  %v41 = vld [vmem:[%s1 + $0x18] sm:$0xf]
  %v42 = vld [vmem:[%s1 + $0x1c] sm:$0xf]
  %v45 = vunpack.c.l.b16 %v33
  %v46 = vunpack.c.l.b16 %v34
  %v47 = vpack.c.b16 %v46, %v45
  %v56 = vunpack.c.l.b16 %v35
  %v57 = vunpack.c.l.b16 %v36
  %v58 = vunpack.c.l.b16 %v37
  %v59 = vunpack.c.l.b16 %v38
  %v60 = vunpack.c.l.b16 %v39
  %v61 = vunpack.c.l.b16 %v40
  %v62 = vunpack.c.l.b16 %v41
  %v63 = vunpack.c.l.b16 %v42
  %v64 = vpack.c.b16 %v57, %v56
  %v65 = vpack.c.b16 %v59, %v58
  %v66 = vpack.c.b16 %v61, %v60
  %v67 = vpack.c.b16 %v63, %v62
  %vm72 = vcmask 523264
  %v74 = vsel %vm72, %v47, 0
  %76 = vmatprep.subr.bf16.mxu0 0
  %77 = vmatpush1.bf16.msra.mxu0 %v64
  %78 = vmatprep.subr.bf16.mxu0 0
  %79 = vmatpush1.bf16.msra.mxu0 %v65
  %80 = vmatprep.subr.bf16.mxu0 0
  %81 = vmatpush1.bf16.msra.mxu0 %v66
  %82 = vmatprep.subr.bf16.mxu0 0
  %83 = vmatpush1.bf16.msra.mxu0 %v67
  %84 = vmatprep.subr.bf16.mxu0 0
  %85 = vmatpush1.bf16.msra.mxu0 0
  %86 = vmatprep.subr.bf16.mxu0 0
  %87 = vmatpush1.bf16.msra.mxu0 0
  %88 = vmatprep.subr.bf16.mxu0 0
  %89 = vmatpush1.bf16.msra.mxu0 0
  %90 = vmatprep.subr.bf16.mxu0 0
  %91 = vmatpush1.bf16.msra.mxu0 0
  %92 = vmatprep.subr.bf16.mxu0 0
  %93 = vmatpush1.bf16.msra.mxu0 0
  %94 = vmatprep.subr.bf16.mxu0 0
  %95 = vmatpush1.bf16.msra.mxu0 0
  %96 = vmatprep.subr.bf16.mxu0 0
  %97 = vmatpush1.bf16.msra.mxu0 0
  %98 = vmatprep.subr.bf16.mxu0 0
  %99 = vmatpush1.bf16.msra.mxu0 0
  %100 = vmatprep.subr.bf16.mxu0 0
  %101 = vmatpush1.bf16.msra.mxu0 0
  %102 = vmatprep.subr.bf16.mxu0 0
  %103 = vmatpush1.bf16.msra.mxu0 0
  %104 = vmatprep.subr.bf16.mxu0 0
  %105 = vmatpush1.bf16.msra.mxu0 0
  %106 = vmatprep.subr.bf16.mxu0 0
  %107 = vmatpush1.bf16.msra.mxu0 0
  %108 = vmatprep.mubr.bf16.mxu0 0
  %109 = vmatmul.mubr.bf16.gmra.mrb[0].mxu0 %v74
  %v110 = vpop.f32.mrb[0].mxu0
  %v111 = vadd.f32 0.0, %v110
  %v112 = vpop.f32.mrb[0].mxu0
  %v113 = vpop.f32.mrb[0].mxu0
  %v114 = vadd.f32 0.0, %v113
  %v115 = vpop.f32.mrb[0].mxu0
  %116 = vdwg.mxu0
  %v117 = vadd.f32 %v31, %v111
  %v118 = vadd.f32 %v32, %v114
  %vm119 = vcmask 261120
  %120 = vst.msk [vmem:[#allocation2] sm:$0xff] %vm119, %v117
  %121 = vst.msk [vmem:[#allocation2 + $0x8] sm:$0xff] %vm119, %v118
  // Predicated region
  $region30: #{bert_pooled_forward.17} parent=0 // pred_check
    %p122 = pneg %p24
  $region31: #{bert_pooled_forward.17} parent=0 // pred_check_branch
    %124 = sbr.rel (%p122) target = $region33
  $region32: #{bert_pooled_forward.17} parent=0 // pred_region
    %v125 = vld [vmem:[#allocation2] sm:$0xff]
    %v126 = vld [vmem:[#allocation2 + $0x8] sm:$0xff]
    %v127 = vld [vmem:[%s2] sm:$0x1]
    %v129 = vlaneseq
    %v130 = vshrl.u32 %v129, 7
    %v131 = vsub.s32 0, %v130
    %v132 = vrot.slane %v127, %v131
    %v134 = vadd.f32 %v125, %v132
    %v135 = vadd.f32 %v126, %v132
    %v136 = vld [vmem:[%s3] sm:$0xf]
    %v137 = vld [vmem:[%s3 + $0x4] sm:$0xf]
    %v138 = vunpack.c.l.bf16 %v136
    %v139 = vunpack.c.l.bf16 %v137
    %v140 = vadd.f32 %v134, %v138
    %v141 = vadd.f32 %v135, %v139
    %v142 = vsel %vm119, %v140, 0.0
    %143 = vadd.xlane.f32.xlu0 %v142
    %v144 = vpop.xlane.xlu0 %143
    %v145 = vsel %vm119, %v141, 0.0
    %146 = vadd.xlane.f32.xlu0 %v145
    %v147 = vpop.xlane.xlu0 %146
    %v148 = vrcp.pop 32.0
    %v149 = vmul.f32 %v144, %v148
    %v150 = vmul.f32 %v147, %v148
    %v151 = vsub.f32 %v140, %v149
    %v152 = vsub.f32 %v141, %v150
    %v153 = vmul.f32 %v151, %v151
    %v154 = vmul.f32 %v152, %v152
    %v155 = vsel %vm119, %v153, 0.0
    %156 = vadd.xlane.f32.xlu0 %v155
    %v157 = vpop.xlane.xlu0 %156
    %v158 = vsel %vm119, %v154, 0.0
    %159 = vadd.xlane.f32.xlu0 %v158
    %v160 = vpop.xlane.xlu0 %159
    %v161 = vmul.f32 %v157, %v148
    %v162 = vmul.f32 %v160, %v148
    %v163 = vadd.f32 %v161, 1e-12
    %v164 = vadd.f32 %v162, 1e-12
    %v165 = vrsqrt.pop %v163
    %v166 = vrsqrt.pop %v164
    %v167 = vmul.f32 %v151, %v165
    %v168 = vmul.f32 %v152, %v166
    %v169 = vld [vmem:[%s4] sm:$0x1]
    %v171 = vlaneseq
    %v172 = vshrl.u32 %v171, 7
    %v173 = vsub.s32 0, %v172
    %v174 = vrot.slane %v169, %v173
    %v176 = vmul.f32 %v167, %v174
    %v177 = vmul.f32 %v168, %v174
    %v178 = vld [vmem:[%s5] sm:$0x1]
    %v180 = vlaneseq
    %v181 = vshrl.u32 %v180, 7
    %v182 = vsub.s32 0, %v181
    %v183 = vrot.slane %v178, %v182
    %v185 = vadd.f32 %v176, %v183
    %v186 = vadd.f32 %v177, %v183
    %v187 = vpack.c.bf16 %v186, %v185
    %v189 = vunpack.c.l.b16 %v187
    %v190 = vunpack.c.h.b16 %v187
    %v191 = vpack.c.b16 %v189, %v189
    %v192 = vpack.c.b16 %v190, %v190
    %vm195 = vcmask 257024
    %196 = vst.msk [vmem:[%s6] sm:$0xf] %vm195, %v191
    %197 = vst.msk [vmem:[%s6 + $0x4] sm:$0xf] %vm195, %v192
  $region33: #{bert_pooled_forward.17} parent=0 // pred_fallthru
    _
  // Predicated region
  $region34: #{bert_pooled_forward.17} parent=0 // pred_check
    _
  $region35: #{bert_pooled_forward.17} parent=0 // pred_check_branch
    %199 = sbr.rel (0) target = $region37
  $region36: #{bert_pooled_forward.17} parent=0 // pred_region
    _
  $region37: #{bert_pooled_forward.17} parent=0 // pred_fallthru
    _
  // Predicated region
  $region38: #{bert_pooled_forward.17} parent=0 // pred_check
    _
  $region39: #{bert_pooled_forward.17} parent=0 // pred_check_branch
    %201 = sbr.rel (0) target = $region41
  $region40: #{bert_pooled_forward.17} parent=0 // pred_region
    _
  $region41: #{bert_pooled_forward.17} parent=0 // pred_fallthru
    _

</llo_original>
